<compile_context>
chip_gen: v7x
topology: tpu7x:2x2x1
jax: 0.10.0
libtpu: 0.0.40
codegen_flags: <defaults>
</compile_context>

<pallas_src>
import jax
import jax.numpy as jnp
import numpy as np
from jax.experimental import pallas as pl
from jax.experimental.pallas import tpu as pltpu

HERMITE_BASIS = [[1], [0, 1], [-1, 0, 1], [0, -3, 0, 1],
                 [3, 0, -6, 0, 1], [0, 15, 0, -10, 0, 1],
                 [-15, 0, 45, 0, -15, 0, 1]]


def _resolve_degree(power: int) -> int:
    d = 2 + power % (len(HERMITE_BASIS) - 2)
    while d >= len(HERMITE_BASIS):      # never fires (2 + k%5 <= 6); kept for fidelity
        d -= 1
    return d


def _coeff_sum(power: int) -> float:
    return float(sum(HERMITE_BASIS[_resolve_degree(power)]))


# ----------------------------------------------------------------------------- kernel
def _affine_kernel(x_ref, w_ref, b_ref, o_ref):
    # x streams in its native dtype; upcast happens in VMEM.
    x = x_ref[...].astype(jnp.float32)                              # (TB, L_in)
    out = jnp.dot(x, w_ref[...], preferred_element_type=jnp.float32,
                  precision=jax.lax.Precision.HIGHEST)              # exact f32 MXU
    o_ref[...] = (out + b_ref[...]).astype(o_ref.dtype)             # (TB, L_out)


# ----------------------------------------------------------------------------- wrapper
def _vmem_budget_bytes():
    """Budget for the double-buffered streamed blocks. Safe inside every
    generation's scoped-VMEM default (v5e 16 MiB, v6e/v7x 32 MiB) with headroom
    for the resident parameter blocks and internal scratch."""
    try:
        cap = getattr(pltpu.get_tpu_info(), "vmem_capacity_bytes", None)
        if cap:                                   # 128 MiB v5e/v6e, 64 MiB v7x
            return min(10 * 1024 * 1024, cap // 8)
    except Exception:
        pass
    return 8 * 1024 * 1024


def _pick_tile(rows, in_lanes, out_lanes, in_itemsize, budget_bytes, cap=2048):
    """Largest batch-tile whose *padded* double-buffered footprint fits the budget."""
    in_pad = -(-in_lanes // 128) * 128            # lane dim pads to 128
    out_pad = -(-out_lanes // 128) * 128
    per_row = 2 * (in_pad * in_itemsize + out_pad * 4)   # 2x = double buffering
    tb = max(8, min(cap, budget_bytes // max(per_row, 1)))
    tb = (tb // 8) * 8                            # sublane dim multiple of 8
    if rows <= tb:
        return rows                               # single block == full array (always legal)
    return tb


def hermite_dict_forward(x, centers, steepnesses, coeff_sums, koopman_w):
    """Fused lift + Koopman forward.

    x:           (B, dim)   native dtype (f32/bf16), streamed in batch tiles
    centers:     (P, dim)   per-poly centers
    steepnesses: (P, dim)   per-poly steepnesses
    coeff_sums:  (P,)       sum(HERMITE_BASIS[degree_p]) for each poly
    koopman_w:   (K, K)     K = 1 + dim + P, nn.Linear weight (out = lift @ W^T)
    returns:     (B, K)     float32
    """
    B, dim = x.shape
    P = centers.shape[0]
    koop_dim = 1 + dim + P
    assert koopman_w.shape == (koop_dim, koop_dim)

    # ---- fold the entire lift + Koopman into a single affine map (params only) ----
    cs = jnp.asarray(coeff_sums, jnp.float32).reshape(P, 1)
    s_scaled = steepnesses.astype(jnp.float32) * cs                    # (P, dim)
    off = jnp.sum(centers.astype(jnp.float32) * s_scaled,
                  axis=1, keepdims=True).T                             # (1, P)
    kw = koopman_w.astype(jnp.float32)
    k0 = kw[:, 0].reshape(1, koop_dim)                                 # constant-1 column
    k1t = kw[:, 1:1 + dim].T                                           # (dim, koopDim)
    k2t = kw[:, 1 + dim:].T                                            # (P,   koopDim)
    w_eff = k1t + s_scaled.T @ k2t                                     # (dim, koopDim)
    b_eff = k0 - off @ k2t                                             # (1,   koopDim)

    # ---- lane-density packing: g original rows per packed row (free bit-reshape) ----
    g = 1
    if 0 < dim < 128 and 128 % dim == 0 and B % (128 // dim) == 0:
        g = 128 // dim
    if g > 1:
        x_in = x.reshape(B // g, g * dim)                              # contiguous: no copy
        w_in = jnp.kron(jnp.eye(g, dtype=jnp.float32), w_eff)          # block-diag (g*dim, g*K)
        b_in = jnp.tile(b_eff, (1, g))                                 # (1, g*K)
    else:
        # TODO(synk): batches not divisible by 128//dim fall back to the lane-padded
        # layout (dim / koop_dim < 128 lanes); correct, just less lane-dense.
        x_in, w_in, b_in = x, w_eff, b_eff

    rows, in_l = x_in.shape
    out_l = w_in.shape[1]
    tb = _pick_tile(rows, in_l, out_l, jnp.dtype(x.dtype).itemsize, _vmem_budget_bytes())

    out = pl.pallas_call(
        _affine_kernel,
        out_shape=jax.ShapeDtypeStruct((rows, out_l), jnp.float32),
        grid_spec=pltpu.PrefetchScalarGridSpec(
            num_scalar_prefetch=0,
            grid=(pl.cdiv(rows, tb),),                    # ragged last block handled by Pallas
            in_specs=[
                pl.BlockSpec((tb, in_l), lambda i: (i, 0)),            # streamed batch tiles
                pl.BlockSpec((w_in.shape[0], out_l), lambda i: (0, 0)),  # resident params
                pl.BlockSpec((1, out_l), lambda i: (0, 0)),              # resident bias
            ],
            out_specs=pl.BlockSpec((tb, out_l), lambda i: (i, 0)),
        ),
        compiler_params=pltpu.CompilerParams(
            dimension_semantics=("parallel",)),           # lets v7x's 2 TCs split the batch
    )(x_in, w_in, b_in)

    if g > 1:
        out = out.reshape(B, koop_dim)                    # free bit-reshape back
    return out


# ----------------------------------------------------------------------------- reference
def hermite_dict_reference(x, centers, steepnesses, coeff_sums, koopman_w):
    """Literal (unfolded) float64 numpy re-implementation of the PyTorch forward."""
    x = np.asarray(x, np.float64)
    centers = np.asarray(centers, np.float64)
    steeps = np.asarray(steepnesses, np.float64)
    kw = np.asarray(koopman_w, np.float64)
    B = x.shape[0]
    polys = []
    for p in range(centers.shape[0]):
        poly_arg = x - centers[p][None, :]           # torch.sub(x, centers)
        poly = poly_arg * coeff_sums[p]              # calc_hermite == x * sum(basis)
        weight_poly = poly * steeps[p][None, :]      # torch.mul(poly, steepnesses)
        polys.append(weight_poly.sum(axis=1))        # torch.sum(..., axis=1)
    polys = np.stack(polys, axis=0)                  # (P, B)
    lifted = np.concatenate([np.ones((1, B)), x.T, polys], axis=0).T   # (B, koopDim)
    return lifted @ kw.T                             # nn.Linear(koopDim, koopDim, bias=False)


if __name__ == "__main__":
    # Small shapes consistent with the module: low-dim dynamical-system state,
    # a handful of hermite dictionary functions, modest batch.
    dim = 4
    powers = [1, 2, 3]
    num_of_each_power = [2, 1, 1]

    poly_powers = []
    for pw, n in zip(powers, num_of_each_power):
        poly_powers += [pw] * n
    P = len(poly_powers)
    koop_dim = 1 + dim + P
    coeff_sums = [_coeff_sum(pw) for pw in poly_powers]

    key = jax.random.PRNGKey(0)
    k_x, k_c, k_s, k_w = jax.random.split(key, 4)
    # nn.init.uniform_(param, 0, 10) / kaiming_normal_ -> deterministic synthetic init
    centers = jax.random.uniform(k_c, (P, dim), minval=0.0, maxval=10.0,
                                 dtype=jnp.float32)
    steepnesses = jax.random.uniform(k_s, (P, dim), minval=0.0, maxval=10.0,
                                     dtype=jnp.float32)
    koopman_w = (jax.random.normal(k_w, (koop_dim, koop_dim), dtype=jnp.float32)
                 * float(np.sqrt(2.0 / koop_dim)))

    ok = True
    # batch=64 exercises the lane-dense packed path (64 % (128//4) == 0);
    # batch=20 exercises the unpacked ragged-block fallback path.
    for batch in (64, 20):
        x = jax.random.normal(k_x, (batch, dim), dtype=jnp.float32)
        out = hermite_dict_forward(x, centers, steepnesses, coeff_sums, koopman_w)
        out = jax.block_until_ready(out)
        ref = hermite_dict_reference(x, centers, steepnesses, coeff_sums, koopman_w)
        assert out.shape == (batch, koop_dim), out.shape
        if not np.allclose(np.asarray(out, np.float64), ref, rtol=1e-3, atol=5e-2):
            ok = False
            err = np.max(np.abs(np.asarray(out, np.float64) - ref))
            print(f"MISMATCH batch={batch} max_abs_err={err}")

    if ok:
        print("KERNEL_OK")
</pallas_src>

<mosaic_0001>
module attributes {stable_mosaic.version = 11 : i64} {
  func.func @_affine_kernel(%arg0: i32, %arg1: memref<2x128xf32, #tpu.memory_space<vmem>>, %arg2: memref<128x288xf32, #tpu.memory_space<vmem>>, %arg3: memref<1x288xf32, #tpu.memory_space<vmem>>, %arg4: memref<2x288xf32, #tpu.memory_space<vmem>>) attributes {dimension_semantics = [#tpu.dimension_semantics<parallel>], iteration_bounds = array<i64: 1>, scalar_prefetch = 0 : i64, scratch_operands = 0 : i64, tpu.core_type = #tpu.core_type<tc>, window_params = [{transform_indices = @transform_0, window_bounds = array<i64: 2, 128>}, {pipeline_mode = #tpu.pipeline_mode<synchronous>, transform_indices = @transform_1, window_bounds = array<i64: 128, 288>}, {pipeline_mode = #tpu.pipeline_mode<synchronous>, transform_indices = @transform_2, window_bounds = array<i64: 1, 288>}, {transform_indices = @transform_3, window_bounds = array<i64: 2, 288>}]} {
    %c0 = arith.constant 0 : index
    %c0_0 = arith.constant 0 : index
    %0 = vector.load %arg1[%c0, %c0_0] : memref<2x128xf32, #tpu.memory_space<vmem>>, vector<2x128xf32>
    %c0_1 = arith.constant 0 : index
    %c0_2 = arith.constant 0 : index
    %1 = vector.load %arg2[%c0_1, %c0_2] : memref<128x288xf32, #tpu.memory_space<vmem>>, vector<128x288xf32>
    %cst = arith.constant dense<0.000000e+00> : vector<2x288xf32>
    %2 = tpu.matmul %0, %1, %cst {dimension_numbers = #tpu.dot_dimension_numbers<[1], [0], [0], [1], [0, 0, 1, 1], [], []>, precision = #tpu.contract_precision<fp32>} : vector<2x128xf32>, vector<128x288xf32>, vector<2x288xf32> -> vector<2x288xf32>
    %c0_3 = arith.constant 0 : index
    %c0_4 = arith.constant 0 : index
    %3 = vector.load %arg3[%c0_3, %c0_4] : memref<1x288xf32, #tpu.memory_space<vmem>>, vector<1x288xf32>
    %4 = vector.broadcast %3 : vector<1x288xf32> to vector<2x288xf32>
    %5 = arith.addf %2, %4 : vector<2x288xf32>
    %c0_5 = arith.constant 0 : index
    %c0_6 = arith.constant 0 : index
    %6 = vector.load %arg4[%c0_5, %c0_6] : memref<2x288xf32, #tpu.memory_space<vmem>>, vector<2x288xf32>
    tpu.vector_store %arg4[%c0_5, %c0_6], %5 {strides = array<i32>} : memref<2x288xf32, #tpu.memory_space<vmem>>, vector<2x288xf32>,
    return
  }
  func.func @transform_0(%arg0: i32) -> (i32, i32) {
    %c0_i32 = arith.constant 0 : i32
    %c0_i32_0 = arith.constant 0 : i32
    return %arg0, %c0_i32 : i32, i32
  }
  func.func @transform_1(%arg0: i32) -> (i32, i32) {
    %c0_i32 = arith.constant 0 : i32
    %c0_i32_0 = arith.constant 0 : i32
    %c0_i32_1 = arith.constant 0 : i32
    return %c0_i32, %c0_i32_0 : i32, i32
  }
  func.func @transform_2(%arg0: i32) -> (i32, i32) {
    %c0_i32 = arith.constant 0 : i32
    %c0_i32_0 = arith.constant 0 : i32
    %c0_i32_1 = arith.constant 0 : i32
    return %c0_i32, %c0_i32_0 : i32, i32
  }
  func.func @transform_3(%arg0: i32) -> (i32, i32) {
    %c0_i32 = arith.constant 0 : i32
    %c0_i32_0 = arith.constant 0 : i32
    return %arg0, %c0_i32 : i32, i32
  }
}

</mosaic_0001>

<llo_original>
// kernel: tpu_custom_call.1
$region0: #{tpu_custom_call.1}
  #allocation0 [shape = 'u32[]', space=smem, size = 0x4, offset = 0x4, fixed_abs, tag = 'smem constant byte address 0x4 - core index']
  #allocation1 [shape = 'u32[144,128]{1,0:T(1,128)}', space=vmem, size = 0x12000, scoped, tag = 'internal scratch']
  %s0 = inlined_call_operand.vmem [shape: f32[2,128], index: 0, kind: input, shape index: {}]
  %s1 = inlined_call_operand.vmem [shape: f32[128,288], index: 1, kind: input, shape index: {}]
  %s2 = inlined_call_operand.vmem [shape: f32[1,288], index: 2, kind: input, shape index: {}]
  %s3 = inlined_call_operand.hbm [shape: f32[2,288], index: 3, kind: output, shape index: {}]
  %s4 = sld [smem:[#allocation0]]
  $region22: #{tpu_custom_call.1} parent=0
    _
  %s6 = ssub.s32 1, %s4
  %s7 = scalar_select 0, %s6, %s4
  $region1: #{tpu_custom_call.1} parent=0
    #allocation2 [shape = 'u8[3072]{0}', space=vmem, size = 0xc00, scoped, tag = 'output window, operand 0, single buffered']
    #allocation3 [shape = 's32[1]{0}', space=sflag, size = 0x4, scoped, tag = 'scoped memory for tpu_custom_call.1']
    %8 = vsyncpa [#allocation3], 0
    // Predicated region
    $region2: #{tpu_custom_call.1} parent=1 // pred_check
      _
    $region3: #{tpu_custom_call.1} parent=1 // pred_check_branch
      %10 = sbr.rel (0) target = $region5
    $region4: #{tpu_custom_call.1} parent=1 // pred_region
      _
    $region5: #{tpu_custom_call.1} parent=1 // pred_fallthru
      _
    // Predicated region
    $region6: #{tpu_custom_call.1} parent=1 // pred_check
      _
    $region7: #{tpu_custom_call.1} parent=1 // pred_check_branch
      %12 = sbr.rel (0) target = $region9
    $region8: #{tpu_custom_call.1} parent=1 // pred_region
      _
    $region9: #{tpu_custom_call.1} parent=1 // pred_fallthru
      _
    // Predicated region
    $region10: #{tpu_custom_call.1} parent=1 // pred_check
      _
    $region11: #{tpu_custom_call.1} parent=1 // pred_check_branch
      %14 = sbr.rel (0) target = $region13
    $region12: #{tpu_custom_call.1} parent=1 // pred_region
      _
    $region13: #{tpu_custom_call.1} parent=1 // pred_fallthru
      _
    %v15 = vld [vmem:[%s0] sm:$0x3]
    %v16 = vld [vmem:[%s1] sm:$0xff]
    %v17 = vld [vmem:[%s1 + $0x8] sm:$0xff]
    %v18 = vld [vmem:[%s1 + $0x10] sm:$0xff]
    %v19 = vld [vmem:[%s1 + $0x18] sm:$0xff]
    %v20 = vld [vmem:[%s1 + $0x20] sm:$0xff]
    %v21 = vld [vmem:[%s1 + $0x28] sm:$0xff]
    %v22 = vld [vmem:[%s1 + $0x30] sm:$0xff]
    %v23 = vld [vmem:[%s1 + $0x38] sm:$0xff]
    %v24 = vld [vmem:[%s1 + $0x40] sm:$0xff]
    %v25 = vld [vmem:[%s1 + $0x48] sm:$0xff]
    %v26 = vld [vmem:[%s1 + $0x50] sm:$0xff]
    %v27 = vld [vmem:[%s1 + $0x58] sm:$0xff]
    %v28 = vld [vmem:[%s1 + $0x60] sm:$0xff]
    %v29 = vld [vmem:[%s1 + $0x68] sm:$0xff]
    %v30 = vld [vmem:[%s1 + $0x70] sm:$0xff]
    %v31 = vld [vmem:[%s1 + $0x78] sm:$0xff]
    %v32 = vld [vmem:[%s1 + $0x80] sm:$0xff]
    %v33 = vld [vmem:[%s1 + $0x88] sm:$0xff]
    %v34 = vld [vmem:[%s1 + $0x90] sm:$0xff]
    %v35 = vld [vmem:[%s1 + $0x98] sm:$0xff]
    %v36 = vld [vmem:[%s1 + $0xa0] sm:$0xff]
    %v37 = vld [vmem:[%s1 + $0xa8] sm:$0xff]
    %v38 = vld [vmem:[%s1 + $0xb0] sm:$0xff]
    %v39 = vld [vmem:[%s1 + $0xb8] sm:$0xff]
    %v40 = vld [vmem:[%s1 + $0xc0] sm:$0xff]
    %v41 = vld [vmem:[%s1 + $0xc8] sm:$0xff]
    %v42 = vld [vmem:[%s1 + $0xd0] sm:$0xff]
    %v43 = vld [vmem:[%s1 + $0xd8] sm:$0xff]
    %v44 = vld [vmem:[%s1 + $0xe0] sm:$0xff]
    %v45 = vld [vmem:[%s1 + $0xe8] sm:$0xff]
    %v46 = vld [vmem:[%s1 + $0xf0] sm:$0xff]
    %v47 = vld [vmem:[%s1 + $0xf8] sm:$0xff]
    %v48 = vld [vmem:[%s1 + $0x100] sm:$0xff]
    %v49 = vld [vmem:[%s1 + $0x108] sm:$0xff]
    %v50 = vld [vmem:[%s1 + $0x110] sm:$0xff]
    %v51 = vld [vmem:[%s1 + $0x118] sm:$0xff]
    %v52 = vld [vmem:[%s1 + $0x120] sm:$0xff]
    %v53 = vld [vmem:[%s1 + $0x128] sm:$0xff]
    %v54 = vld [vmem:[%s1 + $0x130] sm:$0xff]
    %v55 = vld [vmem:[%s1 + $0x138] sm:$0xff]
    %v56 = vld [vmem:[%s1 + $0x140] sm:$0xff]
    %v57 = vld [vmem:[%s1 + $0x148] sm:$0xff]
    %v58 = vld [vmem:[%s1 + $0x150] sm:$0xff]
    %v59 = vld [vmem:[%s1 + $0x158] sm:$0xff]
    %v60 = vld [vmem:[%s1 + $0x160] sm:$0xff]
    %v61 = vld [vmem:[%s1 + $0x168] sm:$0xff]
    %v62 = vld [vmem:[%s1 + $0x170] sm:$0xff]
    %v63 = vld [vmem:[%s1 + $0x178] sm:$0xff]
    %v64 = vld [vmem:[%s2] sm:$0x7]
    %v66 = vlaneseq
    %v67 = vshrl.u32 %v66, 7
    %v68 = vsub.s32 0, %v67
    %v69 = vrot.slane %v64, %v68
    %v70 = vlaneseq
    %v71 = vshrl.u32 %v70, 7
    %v72 = vsub.s32 1, %v71
    %v73 = vrot.slane %v64, %v72
    %v74 = vlaneseq
    %v75 = vshrl.u32 %v74, 7
    %v76 = vsub.s32 2, %v75
    %v77 = vrot.slane %v64, %v76
    %v81 = vand.u32 %v17, 4294901760
    %82 = vmatprep.subr.mxu0 %v81
    %v83 = vand.u32 %v16, 4294901760
    %84 = vmatpush1.msra.mxu0 %v83
    %v85 = vand.u32 %v20, 4294901760
    %86 = vmatprep.subr.mxu0 %v85
    %v87 = vand.u32 %v19, 4294901760
    %88 = vmatpush1.msra.mxu0 %v87
    %v89 = vand.u32 %v23, 4294901760
    %90 = vmatprep.subr.mxu0 %v89
    %v91 = vand.u32 %v22, 4294901760
    %92 = vmatpush1.msra.mxu0 %v91
    %v93 = vand.u32 %v26, 4294901760
    %94 = vmatprep.subr.mxu0 %v93
    %v95 = vand.u32 %v25, 4294901760
    %96 = vmatpush1.msra.mxu0 %v95
    %v97 = vand.u32 %v29, 4294901760
    %98 = vmatprep.subr.mxu0 %v97
    %v99 = vand.u32 %v28, 4294901760
    %100 = vmatpush1.msra.mxu0 %v99
    %v101 = vand.u32 %v32, 4294901760
    %102 = vmatprep.subr.mxu0 %v101
    %v103 = vand.u32 %v31, 4294901760
    %104 = vmatpush1.msra.mxu0 %v103
    %v105 = vand.u32 %v35, 4294901760
    %106 = vmatprep.subr.mxu0 %v105
    %v107 = vand.u32 %v34, 4294901760
    %108 = vmatpush1.msra.mxu0 %v107
    %v109 = vand.u32 %v38, 4294901760
    %110 = vmatprep.subr.mxu0 %v109
    %v111 = vand.u32 %v37, 4294901760
    %112 = vmatpush1.msra.mxu0 %v111
    %v113 = vand.u32 %v41, 4294901760
    %114 = vmatprep.subr.mxu0 %v113
    %v115 = vand.u32 %v40, 4294901760
    %116 = vmatpush1.msra.mxu0 %v115
    %v117 = vand.u32 %v44, 4294901760
    %118 = vmatprep.subr.mxu0 %v117
    %v119 = vand.u32 %v43, 4294901760
    %120 = vmatpush1.msra.mxu0 %v119
    %v121 = vand.u32 %v47, 4294901760
    %122 = vmatprep.subr.mxu0 %v121
    %v123 = vand.u32 %v46, 4294901760
    %124 = vmatpush1.msra.mxu0 %v123
    %v125 = vand.u32 %v50, 4294901760
    %126 = vmatprep.subr.mxu0 %v125
    %v127 = vand.u32 %v49, 4294901760
    %128 = vmatpush1.msra.mxu0 %v127
    %v129 = vand.u32 %v53, 4294901760
    %130 = vmatprep.subr.mxu0 %v129
    %v131 = vand.u32 %v52, 4294901760
    %132 = vmatpush1.msra.mxu0 %v131
    %v133 = vand.u32 %v56, 4294901760
    %134 = vmatprep.subr.mxu0 %v133
    %v135 = vand.u32 %v55, 4294901760
    %136 = vmatpush1.msra.mxu0 %v135
    %v137 = vand.u32 %v59, 4294901760
    %138 = vmatprep.subr.mxu0 %v137
    %v139 = vand.u32 %v58, 4294901760
    %140 = vmatpush1.msra.mxu0 %v139
    %v141 = vand.u32 %v62, 4294901760
    %142 = vmatprep.subr.mxu0 %v141
    %v143 = vand.u32 %v61, 4294901760
    %144 = vmatpush1.msra.mxu0 %v143
    %145 = vmatprep.subr.mxu0 0.0
    %146 = vmatpush1.msra.mxu0 0.0
    %147 = vmatprep.subr.mxu0 0.0
    %148 = vmatpush1.msra.mxu0 0.0
    %149 = vmatprep.subr.mxu0 0.0
    %150 = vmatpush1.msra.mxu0 0.0
    %151 = vmatprep.subr.mxu0 0.0
    %152 = vmatpush1.msra.mxu0 0.0
    %153 = vmatprep.subr.mxu0 0.0
    %154 = vmatpush1.msra.mxu0 0.0
    %155 = vmatprep.subr.mxu0 0.0
    %156 = vmatpush1.msra.mxu0 0.0
    %157 = vmatprep.subr.mxu0 0.0
    %158 = vmatpush1.msra.mxu0 0.0
    %159 = vmatprep.subr.mxu0 0.0
    %160 = vmatpush1.msra.mxu0 0.0
    %161 = vmatprep.subr.mxu0 0.0
    %162 = vmatpush1.msra.mxu0 0.0
    %163 = vmatprep.subr.mxu0 0.0
    %164 = vmatpush1.msra.mxu0 0.0
    %165 = vmatprep.subr.mxu0 0.0
    %166 = vmatpush1.msra.mxu0 0.0
    %167 = vmatprep.subr.mxu0 0.0
    %168 = vmatpush1.msra.mxu0 0.0
    %169 = vmatprep.subr.mxu0 0.0
    %170 = vmatpush1.msra.mxu0 0.0
    %171 = vmatprep.subr.mxu0 0.0
    %172 = vmatpush1.msra.mxu0 0.0
    %173 = vmatprep.subr.mxu0 0.0
    %174 = vmatpush1.msra.mxu0 0.0
    %175 = vmatprep.subr.mxu0 0.0
    %176 = vmatpush1.msra.mxu0 0.0
    %177 = vmatprep.mubr.f32.mxu0 0.0
    %v178 = vand.u32 %v15, 4294901760
    %v179 = vsub.f32 %v15, %v178
    %v180 = vand.u32 %v179, 4294901760
    %v181 = vsub.f32 %v179, %v180
    %v182 = vand.u32 %v181, 4294901760
    %183 = vmatmul.mubr.f32.gmra.mrb[0].mxu0 %v182
    %v184 = vpop.f32.mrb[0].mxu0
    %v185 = vadd.f32 %v69, %v184
    %v186 = vpop.f32.mrb[0].mxu0
    %v187 = vadd.f32 %v73, %v186
    %188 = vdwg.mxu0
    %v189 = vand.u32 %v17, 4294901760
    %v190 = vsub.f32 %v17, %v189
    %v191 = vand.u32 %v190, 4294901760
    %v192 = vsub.f32 %v190, %v191
    %v193 = vand.u32 %v192, 4294901760
    %194 = vmatprep.subr.mxu0 %v193
    %v195 = vand.u32 %v16, 4294901760
    %v196 = vsub.f32 %v16, %v195
    %v197 = vand.u32 %v196, 4294901760
    %v198 = vsub.f32 %v196, %v197
    %v199 = vand.u32 %v198, 4294901760
    %200 = vmatpush1.msra.mxu0 %v199
    %v201 = vand.u32 %v20, 4294901760
    %v202 = vsub.f32 %v20, %v201
    %v203 = vand.u32 %v202, 4294901760
    %v204 = vsub.f32 %v202, %v203
    %v205 = vand.u32 %v204, 4294901760
    %206 = vmatprep.subr.mxu0 %v205
    %v207 = vand.u32 %v19, 4294901760
    %v208 = vsub.f32 %v19, %v207
    %v209 = vand.u32 %v208, 4294901760
    %v210 = vsub.f32 %v208, %v209
    %v211 = vand.u32 %v210, 4294901760
    %212 = vmatpush1.msra.mxu0 %v211
    %v213 = vand.u32 %v23, 4294901760
    %v214 = vsub.f32 %v23, %v213
    %v215 = vand.u32 %v214, 4294901760
    %v216 = vsub.f32 %v214, %v215
    %v217 = vand.u32 %v216, 4294901760
    %218 = vmatprep.subr.mxu0 %v217
    %v219 = vand.u32 %v22, 4294901760
    %v220 = vsub.f32 %v22, %v219
    %v221 = vand.u32 %v220, 4294901760
    %v222 = vsub.f32 %v220, %v221
    %v223 = vand.u32 %v222, 4294901760
    %224 = vmatpush1.msra.mxu0 %v223
    %v225 = vand.u32 %v26, 4294901760
    %v226 = vsub.f32 %v26, %v225
    %v227 = vand.u32 %v226, 4294901760
    %v228 = vsub.f32 %v226, %v227
    %v229 = vand.u32 %v228, 4294901760
    %230 = vmatprep.subr.mxu0 %v229
    %v231 = vand.u32 %v25, 4294901760
    %v232 = vsub.f32 %v25, %v231
    %v233 = vand.u32 %v232, 4294901760
    %v234 = vsub.f32 %v232, %v233
    %v235 = vand.u32 %v234, 4294901760
    %236 = vmatpush1.msra.mxu0 %v235
    %v237 = vand.u32 %v29, 4294901760
    %v238 = vsub.f32 %v29, %v237
    %v239 = vand.u32 %v238, 4294901760
    %v240 = vsub.f32 %v238, %v239
    %v241 = vand.u32 %v240, 4294901760
    %242 = vmatprep.subr.mxu0 %v241
    %v243 = vand.u32 %v28, 4294901760
    %v244 = vsub.f32 %v28, %v243
    %v245 = vand.u32 %v244, 4294901760
    %v246 = vsub.f32 %v244, %v245
    %v247 = vand.u32 %v246, 4294901760
    %248 = vmatpush1.msra.mxu0 %v247
    %v249 = vand.u32 %v32, 4294901760
    %v250 = vsub.f32 %v32, %v249
    %v251 = vand.u32 %v250, 4294901760
    %v252 = vsub.f32 %v250, %v251
    %v253 = vand.u32 %v252, 4294901760
    %254 = vmatprep.subr.mxu0 %v253
    %v255 = vand.u32 %v31, 4294901760
    %v256 = vsub.f32 %v31, %v255
    %v257 = vand.u32 %v256, 4294901760
    %v258 = vsub.f32 %v256, %v257
    %v259 = vand.u32 %v258, 4294901760
    %260 = vmatpush1.msra.mxu0 %v259
    %v261 = vand.u32 %v35, 4294901760
    %v262 = vsub.f32 %v35, %v261
    %v263 = vand.u32 %v262, 4294901760
    %v264 = vsub.f32 %v262, %v263
    %v265 = vand.u32 %v264, 4294901760
    %266 = vmatprep.subr.mxu0 %v265
    %v267 = vand.u32 %v34, 4294901760
    %v268 = vsub.f32 %v34, %v267
    %v269 = vand.u32 %v268, 4294901760
    %v270 = vsub.f32 %v268, %v269
    %v271 = vand.u32 %v270, 4294901760
    %272 = vmatpush1.msra.mxu0 %v271
    %v273 = vand.u32 %v38, 4294901760
    %v274 = vsub.f32 %v38, %v273
    %v275 = vand.u32 %v274, 4294901760
    %v276 = vsub.f32 %v274, %v275
    %v277 = vand.u32 %v276, 4294901760
    %278 = vmatprep.subr.mxu0 %v277
    %v279 = vand.u32 %v37, 4294901760
    %v280 = vsub.f32 %v37, %v279
    %v281 = vand.u32 %v280, 4294901760
    %v282 = vsub.f32 %v280, %v281
    %v283 = vand.u32 %v282, 4294901760
    %284 = vmatpush1.msra.mxu0 %v283
    %v285 = vand.u32 %v41, 4294901760
    %v286 = vsub.f32 %v41, %v285
    %v287 = vand.u32 %v286, 4294901760
    %v288 = vsub.f32 %v286, %v287
    %v289 = vand.u32 %v288, 4294901760
    %290 = vmatprep.subr.mxu0 %v289
    %v291 = vand.u32 %v40, 4294901760
    %v292 = vsub.f32 %v40, %v291
    %v293 = vand.u32 %v292, 4294901760
    %v294 = vsub.f32 %v292, %v293
    %v295 = vand.u32 %v294, 4294901760
    %296 = vmatpush1.msra.mxu0 %v295
    %v297 = vand.u32 %v44, 4294901760
    %v298 = vsub.f32 %v44, %v297
    %v299 = vand.u32 %v298, 4294901760
    %v300 = vsub.f32 %v298, %v299
    %v301 = vand.u32 %v300, 4294901760
    %302 = vmatprep.subr.mxu0 %v301
    %v303 = vand.u32 %v43, 4294901760
    %v304 = vsub.f32 %v43, %v303
    %v305 = vand.u32 %v304, 4294901760
    %v306 = vsub.f32 %v304, %v305
    %v307 = vand.u32 %v306, 4294901760
    %308 = vmatpush1.msra.mxu0 %v307
    %v309 = vand.u32 %v47, 4294901760
    %v310 = vsub.f32 %v47, %v309
    %v311 = vand.u32 %v310, 4294901760
    %v312 = vsub.f32 %v310, %v311
    %v313 = vand.u32 %v312, 4294901760
    %314 = vmatprep.subr.mxu0 %v313
    %v315 = vand.u32 %v46, 4294901760
    %v316 = vsub.f32 %v46, %v315
    %v317 = vand.u32 %v316, 4294901760
    %v318 = vsub.f32 %v316, %v317
    %v319 = vand.u32 %v318, 4294901760
    %320 = vmatpush1.msra.mxu0 %v319
    %v321 = vand.u32 %v50, 4294901760
    %v322 = vsub.f32 %v50, %v321
    %v323 = vand.u32 %v322, 4294901760
    %v324 = vsub.f32 %v322, %v323
    %v325 = vand.u32 %v324, 4294901760
    %326 = vmatprep.subr.mxu0 %v325
    %v327 = vand.u32 %v49, 4294901760
    %v328 = vsub.f32 %v49, %v327
    %v329 = vand.u32 %v328, 4294901760
    %v330 = vsub.f32 %v328, %v329
    %v331 = vand.u32 %v330, 4294901760
    %332 = vmatpush1.msra.mxu0 %v331
    %v333 = vand.u32 %v53, 4294901760
    %v334 = vsub.f32 %v53, %v333
    %v335 = vand.u32 %v334, 4294901760
    %v336 = vsub.f32 %v334, %v335
    %v337 = vand.u32 %v336, 4294901760
    %338 = vmatprep.subr.mxu0 %v337
    %v339 = vand.u32 %v52, 4294901760
    %v340 = vsub.f32 %v52, %v339
    %v341 = vand.u32 %v340, 4294901760
    %v342 = vsub.f32 %v340, %v341
    %v343 = vand.u32 %v342, 4294901760
    %344 = vmatpush1.msra.mxu0 %v343
    %v345 = vand.u32 %v56, 4294901760
    %v346 = vsub.f32 %v56, %v345
    %v347 = vand.u32 %v346, 4294901760
    %v348 = vsub.f32 %v346, %v347
    %v349 = vand.u32 %v348, 4294901760
    %350 = vmatprep.subr.mxu0 %v349
    %v351 = vand.u32 %v55, 4294901760
    %v352 = vsub.f32 %v55, %v351
    %v353 = vand.u32 %v352, 4294901760
    %v354 = vsub.f32 %v352, %v353
    %v355 = vand.u32 %v354, 4294901760
    %356 = vmatpush1.msra.mxu0 %v355
    %v357 = vand.u32 %v59, 4294901760
    %v358 = vsub.f32 %v59, %v357
    %v359 = vand.u32 %v358, 4294901760
    %v360 = vsub.f32 %v358, %v359
    %v361 = vand.u32 %v360, 4294901760
    %362 = vmatprep.subr.mxu0 %v361
    %v363 = vand.u32 %v58, 4294901760
    %v364 = vsub.f32 %v58, %v363
    %v365 = vand.u32 %v364, 4294901760
    %v366 = vsub.f32 %v364, %v365
    %v367 = vand.u32 %v366, 4294901760
    %368 = vmatpush1.msra.mxu0 %v367
    %v369 = vand.u32 %v62, 4294901760
    %v370 = vsub.f32 %v62, %v369
    %v371 = vand.u32 %v370, 4294901760
    %v372 = vsub.f32 %v370, %v371
    %v373 = vand.u32 %v372, 4294901760
    %374 = vmatprep.subr.mxu0 %v373
    %v375 = vand.u32 %v61, 4294901760
    %v376 = vsub.f32 %v61, %v375
    %v377 = vand.u32 %v376, 4294901760
    %v378 = vsub.f32 %v376, %v377
    %v379 = vand.u32 %v378, 4294901760
    %380 = vmatpush1.msra.mxu0 %v379
    %381 = vmatprep.subr.mxu0 0.0
    %382 = vmatpush1.msra.mxu0 0.0
    %383 = vmatprep.subr.mxu0 0.0
    %384 = vmatpush1.msra.mxu0 0.0
    %385 = vmatprep.subr.mxu0 0.0
    %386 = vmatpush1.msra.mxu0 0.0
    %387 = vmatprep.subr.mxu0 0.0
    %388 = vmatpush1.msra.mxu0 0.0
    %389 = vmatprep.subr.mxu0 0.0
    %390 = vmatpush1.msra.mxu0 0.0
    %391 = vmatprep.subr.mxu0 0.0
    %392 = vmatpush1.msra.mxu0 0.0
    %393 = vmatprep.subr.mxu0 0.0
    %394 = vmatpush1.msra.mxu0 0.0
    %395 = vmatprep.subr.mxu0 0.0
    %396 = vmatpush1.msra.mxu0 0.0
    %397 = vmatprep.subr.mxu0 0.0
    %398 = vmatpush1.msra.mxu0 0.0
    %399 = vmatprep.subr.mxu0 0.0
    %400 = vmatpush1.msra.mxu0 0.0
    %401 = vmatprep.subr.mxu0 0.0
    %402 = vmatpush1.msra.mxu0 0.0
    %403 = vmatprep.subr.mxu0 0.0
    %404 = vmatpush1.msra.mxu0 0.0
    %405 = vmatprep.subr.mxu0 0.0
    %406 = vmatpush1.msra.mxu0 0.0
    %407 = vmatprep.subr.mxu0 0.0
    %408 = vmatpush1.msra.mxu0 0.0
    %409 = vmatprep.subr.mxu0 0.0
    %410 = vmatpush1.msra.mxu0 0.0
    %411 = vmatprep.subr.mxu0 0.0
    %412 = vmatpush1.msra.mxu0 0.0
    %413 = vmatprep.mubr.f32.mxu0 0.0
    %v414 = vand.u32 %v15, 4294901760
    %415 = vmatmul.mubr.f32.gmra.mrb[0].mxu0 %v414
    %v416 = vpop.f32.mrb[0].mxu0
    %v417 = vadd.f32 %v185, %v416
    %v418 = vpop.f32.mrb[0].mxu0
    %v419 = vadd.f32 %v187, %v418
    %420 = vdwg.mxu0
    %v421 = vand.u32 %v17, 4294901760
    %v422 = vsub.f32 %v17, %v421
    %423 = vmatprep.subr.mxu0 %v422
    %v424 = vand.u32 %v16, 4294901760
    %v425 = vsub.f32 %v16, %v424
    %426 = vmatpush1.msra.mxu0 %v425
    %v427 = vand.u32 %v20, 4294901760
    %v428 = vsub.f32 %v20, %v427
    %429 = vmatprep.subr.mxu0 %v428
    %v430 = vand.u32 %v19, 4294901760
    %v431 = vsub.f32 %v19, %v430
    %432 = vmatpush1.msra.mxu0 %v431
    %v433 = vand.u32 %v23, 4294901760
    %v434 = vsub.f32 %v23, %v433
    %435 = vmatprep.subr.mxu0 %v434
    %v436 = vand.u32 %v22, 4294901760
    %v437 = vsub.f32 %v22, %v436
    %438 = vmatpush1.msra.mxu0 %v437
    %v439 = vand.u32 %v26, 4294901760
    %v440 = vsub.f32 %v26, %v439
    %441 = vmatprep.subr.mxu0 %v440
    %v442 = vand.u32 %v25, 4294901760
    %v443 = vsub.f32 %v25, %v442
    %444 = vmatpush1.msra.mxu0 %v443
    %v445 = vand.u32 %v29, 4294901760
    %v446 = vsub.f32 %v29, %v445
    %447 = vmatprep.subr.mxu0 %v446
    %v448 = vand.u32 %v28, 4294901760
    %v449 = vsub.f32 %v28, %v448
    %450 = vmatpush1.msra.mxu0 %v449
    %v451 = vand.u32 %v32, 4294901760
    %v452 = vsub.f32 %v32, %v451
    %453 = vmatprep.subr.mxu0 %v452
    %v454 = vand.u32 %v31, 4294901760
    %v455 = vsub.f32 %v31, %v454
    %456 = vmatpush1.msra.mxu0 %v455
    %v457 = vand.u32 %v35, 4294901760
    %v458 = vsub.f32 %v35, %v457
    %459 = vmatprep.subr.mxu0 %v458
    %v460 = vand.u32 %v34, 4294901760
    %v461 = vsub.f32 %v34, %v460
    %462 = vmatpush1.msra.mxu0 %v461
    %v463 = vand.u32 %v38, 4294901760
    %v464 = vsub.f32 %v38, %v463
    %465 = vmatprep.subr.mxu0 %v464
    %v466 = vand.u32 %v37, 4294901760
    %v467 = vsub.f32 %v37, %v466
    %468 = vmatpush1.msra.mxu0 %v467
    %v469 = vand.u32 %v41, 4294901760
    %v470 = vsub.f32 %v41, %v469
    %471 = vmatprep.subr.mxu0 %v470
    %v472 = vand.u32 %v40, 4294901760
    %v473 = vsub.f32 %v40, %v472
    %474 = vmatpush1.msra.mxu0 %v473
    %v475 = vand.u32 %v44, 4294901760
    %v476 = vsub.f32 %v44, %v475
    %477 = vmatprep.subr.mxu0 %v476
    %v478 = vand.u32 %v43, 4294901760
    %v479 = vsub.f32 %v43, %v478
    %480 = vmatpush1.msra.mxu0 %v479
    %v481 = vand.u32 %v47, 4294901760
    %v482 = vsub.f32 %v47, %v481
    %483 = vmatprep.subr.mxu0 %v482
    %v484 = vand.u32 %v46, 4294901760
    %v485 = vsub.f32 %v46, %v484
    %486 = vmatpush1.msra.mxu0 %v485
    %v487 = vand.u32 %v50, 4294901760
    %v488 = vsub.f32 %v50, %v487
    %489 = vmatprep.subr.mxu0 %v488
    %v490 = vand.u32 %v49, 4294901760
    %v491 = vsub.f32 %v49, %v490
    %492 = vmatpush1.msra.mxu0 %v491
    %v493 = vand.u32 %v53, 4294901760
    %v494 = vsub.f32 %v53, %v493
    %495 = vmatprep.subr.mxu0 %v494
    %v496 = vand.u32 %v52, 4294901760
    %v497 = vsub.f32 %v52, %v496
    %498 = vmatpush1.msra.mxu0 %v497
    %v499 = vand.u32 %v56, 4294901760
    %v500 = vsub.f32 %v56, %v499
    %501 = vmatprep.subr.mxu0 %v500
    %v502 = vand.u32 %v55, 4294901760
    %v503 = vsub.f32 %v55, %v502
    %504 = vmatpush1.msra.mxu0 %v503
    %v505 = vand.u32 %v59, 4294901760
    %v506 = vsub.f32 %v59, %v505
    %507 = vmatprep.subr.mxu0 %v506
    %v508 = vand.u32 %v58, 4294901760
    %v509 = vsub.f32 %v58, %v508
    %510 = vmatpush1.msra.mxu0 %v509
    %v511 = vand.u32 %v62, 4294901760
    %v512 = vsub.f32 %v62, %v511
    %513 = vmatprep.subr.mxu0 %v512
    %v514 = vand.u32 %v61, 4294901760
    %v515 = vsub.f32 %v61, %v514
    %516 = vmatpush1.msra.mxu0 %v515
    %517 = vmatprep.subr.mxu0 0.0
    %518 = vmatpush1.msra.mxu0 0.0
    %519 = vmatprep.subr.mxu0 0.0
    %520 = vmatpush1.msra.mxu0 0.0
    %521 = vmatprep.subr.mxu0 0.0
    %522 = vmatpush1.msra.mxu0 0.0
    %523 = vmatprep.subr.mxu0 0.0
    %524 = vmatpush1.msra.mxu0 0.0
    %525 = vmatprep.subr.mxu0 0.0
    %526 = vmatpush1.msra.mxu0 0.0
    %527 = vmatprep.subr.mxu0 0.0
    %528 = vmatpush1.msra.mxu0 0.0
    %529 = vmatprep.subr.mxu0 0.0
    %530 = vmatpush1.msra.mxu0 0.0
    %531 = vmatprep.subr.mxu0 0.0
    %532 = vmatpush1.msra.mxu0 0.0
    %533 = vmatprep.subr.mxu0 0.0
    %534 = vmatpush1.msra.mxu0 0.0
    %535 = vmatprep.subr.mxu0 0.0
    %536 = vmatpush1.msra.mxu0 0.0
    %537 = vmatprep.subr.mxu0 0.0
    %538 = vmatpush1.msra.mxu0 0.0
    %539 = vmatprep.subr.mxu0 0.0
    %540 = vmatpush1.msra.mxu0 0.0
    %541 = vmatprep.subr.mxu0 0.0
    %542 = vmatpush1.msra.mxu0 0.0
    %543 = vmatprep.subr.mxu0 0.0
    %544 = vmatpush1.msra.mxu0 0.0
    %545 = vmatprep.subr.mxu0 0.0
    %546 = vmatpush1.msra.mxu0 0.0
    %547 = vmatprep.subr.mxu0 0.0
    %548 = vmatpush1.msra.mxu0 0.0
    %549 = vmatprep.mubr.f32.mxu0 0.0
    %v550 = vand.u32 %v15, 4294901760
    %v551 = vsub.f32 %v15, %v550
    %552 = vmatmul.mubr.f32.gmra.mrb[0].mxu0 %v551
    %v553 = vpop.f32.mrb[0].mxu0
    %v554 = vadd.f32 %v417, %v553
    %v555 = vpop.f32.mrb[0].mxu0
    %v556 = vadd.f32 %v419, %v555
    %557 = vdwg.mxu0
    %v558 = vand.u32 %v17, 4294901760
    %559 = vmatprep.subr.mxu0 %v558
    %v560 = vand.u32 %v16, 4294901760
    %561 = vmatpush1.msra.mxu0 %v560
    %v562 = vand.u32 %v20, 4294901760
    %563 = vmatprep.subr.mxu0 %v562
    %v564 = vand.u32 %v19, 4294901760
    %565 = vmatpush1.msra.mxu0 %v564
    %v566 = vand.u32 %v23, 4294901760
    %567 = vmatprep.subr.mxu0 %v566
    %v568 = vand.u32 %v22, 4294901760
    %569 = vmatpush1.msra.mxu0 %v568
    %v570 = vand.u32 %v26, 4294901760
    %571 = vmatprep.subr.mxu0 %v570
    %v572 = vand.u32 %v25, 4294901760
    %573 = vmatpush1.msra.mxu0 %v572
    %v574 = vand.u32 %v29, 4294901760
    %575 = vmatprep.subr.mxu0 %v574
    %v576 = vand.u32 %v28, 4294901760
    %577 = vmatpush1.msra.mxu0 %v576
    %v578 = vand.u32 %v32, 4294901760
    %579 = vmatprep.subr.mxu0 %v578
    %v580 = vand.u32 %v31, 4294901760
    %581 = vmatpush1.msra.mxu0 %v580
    %v582 = vand.u32 %v35, 4294901760
    %583 = vmatprep.subr.mxu0 %v582
    %v584 = vand.u32 %v34, 4294901760
    %585 = vmatpush1.msra.mxu0 %v584
    %v586 = vand.u32 %v38, 4294901760
    %587 = vmatprep.subr.mxu0 %v586
    %v588 = vand.u32 %v37, 4294901760
    %589 = vmatpush1.msra.mxu0 %v588
    %v590 = vand.u32 %v41, 4294901760
    %591 = vmatprep.subr.mxu0 %v590
    %v592 = vand.u32 %v40, 4294901760
    %593 = vmatpush1.msra.mxu0 %v592
    %v594 = vand.u32 %v44, 4294901760
    %595 = vmatprep.subr.mxu0 %v594
    %v596 = vand.u32 %v43, 4294901760
    %597 = vmatpush1.msra.mxu0 %v596
    %v598 = vand.u32 %v47, 4294901760
    %599 = vmatprep.subr.mxu0 %v598
    %v600 = vand.u32 %v46, 4294901760
    %601 = vmatpush1.msra.mxu0 %v600
    %v602 = vand.u32 %v50, 4294901760
    %603 = vmatprep.subr.mxu0 %v602
    %v604 = vand.u32 %v49, 4294901760
    %605 = vmatpush1.msra.mxu0 %v604
    %v606 = vand.u32 %v53, 4294901760
    %607 = vmatprep.subr.mxu0 %v606
    %v608 = vand.u32 %v52, 4294901760
    %609 = vmatpush1.msra.mxu0 %v608
    %v610 = vand.u32 %v56, 4294901760
    %611 = vmatprep.subr.mxu0 %v610
    %v612 = vand.u32 %v55, 4294901760
    %613 = vmatpush1.msra.mxu0 %v612
    %v614 = vand.u32 %v59, 4294901760
    %615 = vmatprep.subr.mxu0 %v614
    %v616 = vand.u32 %v58, 4294901760
    %617 = vmatpush1.msra.mxu0 %v616
    %v618 = vand.u32 %v62, 4294901760
    %619 = vmatprep.subr.mxu0 %v618
    %v620 = vand.u32 %v61, 4294901760
    %621 = vmatpush1.msra.mxu0 %v620
    %622 = vmatprep.subr.mxu0 0.0
    %623 = vmatpush1.msra.mxu0 0.0
    %624 = vmatprep.subr.mxu0 0.0
    %625 = vmatpush1.msra.mxu0 0.0
    %626 = vmatprep.subr.mxu0 0.0
    %627 = vmatpush1.msra.mxu0 0.0
    %628 = vmatprep.subr.mxu0 0.0
    %629 = vmatpush1.msra.mxu0 0.0
    %630 = vmatprep.subr.mxu0 0.0
    %631 = vmatpush1.msra.mxu0 0.0
    %632 = vmatprep.subr.mxu0 0.0
    %633 = vmatpush1.msra.mxu0 0.0
    %634 = vmatprep.subr.mxu0 0.0
    %635 = vmatpush1.msra.mxu0 0.0
    %636 = vmatprep.subr.mxu0 0.0
    %637 = vmatpush1.msra.mxu0 0.0
    %638 = vmatprep.subr.mxu0 0.0
    %639 = vmatpush1.msra.mxu0 0.0
    %640 = vmatprep.subr.mxu0 0.0
    %641 = vmatpush1.msra.mxu0 0.0
    %642 = vmatprep.subr.mxu0 0.0
    %643 = vmatpush1.msra.mxu0 0.0
    %644 = vmatprep.subr.mxu0 0.0
    %645 = vmatpush1.msra.mxu0 0.0
    %646 = vmatprep.subr.mxu0 0.0
    %647 = vmatpush1.msra.mxu0 0.0
    %648 = vmatprep.subr.mxu0 0.0
    %649 = vmatpush1.msra.mxu0 0.0
    %650 = vmatprep.subr.mxu0 0.0
    %651 = vmatpush1.msra.mxu0 0.0
    %652 = vmatprep.subr.mxu0 0.0
    %653 = vmatpush1.msra.mxu0 0.0
    %654 = vmatprep.mubr.f32.mxu0 0.0
    %v655 = vand.u32 %v15, 4294901760
    %v656 = vsub.f32 %v15, %v655
    %v657 = vand.u32 %v656, 4294901760
    %658 = vmatmul.mubr.f32.gmra.mrb[0].mxu0 %v657
    %v659 = vpop.f32.mrb[0].mxu0
    %v660 = vadd.f32 %v554, %v659
    %v661 = vpop.f32.mrb[0].mxu0
    %v662 = vadd.f32 %v556, %v661
    %663 = vdwg.mxu0
    %v664 = vand.u32 %v17, 4294901760
    %v665 = vsub.f32 %v17, %v664
    %v666 = vand.u32 %v665, 4294901760
    %667 = vmatprep.subr.mxu0 %v666
    %v668 = vand.u32 %v16, 4294901760
    %v669 = vsub.f32 %v16, %v668
    %v670 = vand.u32 %v669, 4294901760
    %671 = vmatpush1.msra.mxu0 %v670
    %v672 = vand.u32 %v20, 4294901760
    %v673 = vsub.f32 %v20, %v672
    %v674 = vand.u32 %v673, 4294901760
    %675 = vmatprep.subr.mxu0 %v674
    %v676 = vand.u32 %v19, 4294901760
    %v677 = vsub.f32 %v19, %v676
    %v678 = vand.u32 %v677, 4294901760
    %679 = vmatpush1.msra.mxu0 %v678
    %v680 = vand.u32 %v23, 4294901760
    %v681 = vsub.f32 %v23, %v680
    %v682 = vand.u32 %v681, 4294901760
    %683 = vmatprep.subr.mxu0 %v682
    %v684 = vand.u32 %v22, 4294901760
    %v685 = vsub.f32 %v22, %v684
    %v686 = vand.u32 %v685, 4294901760
    %687 = vmatpush1.msra.mxu0 %v686
    %v688 = vand.u32 %v26, 4294901760
    %v689 = vsub.f32 %v26, %v688
    %v690 = vand.u32 %v689, 4294901760
    %691 = vmatprep.subr.mxu0 %v690
    %v692 = vand.u32 %v25, 4294901760
    %v693 = vsub.f32 %v25, %v692
    %v694 = vand.u32 %v693, 4294901760
    %695 = vmatpush1.msra.mxu0 %v694
    %v696 = vand.u32 %v29, 4294901760
    %v697 = vsub.f32 %v29, %v696
    %v698 = vand.u32 %v697, 4294901760
    %699 = vmatprep.subr.mxu0 %v698
    %v700 = vand.u32 %v28, 4294901760
    %v701 = vsub.f32 %v28, %v700
    %v702 = vand.u32 %v701, 4294901760
    %703 = vmatpush1.msra.mxu0 %v702
    %v704 = vand.u32 %v32, 4294901760
    %v705 = vsub.f32 %v32, %v704
    %v706 = vand.u32 %v705, 4294901760
    %707 = vmatprep.subr.mxu0 %v706
    %v708 = vand.u32 %v31, 4294901760
    %v709 = vsub.f32 %v31, %v708
    %v710 = vand.u32 %v709, 4294901760
    %711 = vmatpush1.msra.mxu0 %v710
    %v712 = vand.u32 %v35, 4294901760
    %v713 = vsub.f32 %v35, %v712
    %v714 = vand.u32 %v713, 4294901760
    %715 = vmatprep.subr.mxu0 %v714
    %v716 = vand.u32 %v34, 4294901760
    %v717 = vsub.f32 %v34, %v716
    %v718 = vand.u32 %v717, 4294901760
    %719 = vmatpush1.msra.mxu0 %v718
    %v720 = vand.u32 %v38, 4294901760
    %v721 = vsub.f32 %v38, %v720
    %v722 = vand.u32 %v721, 4294901760
    %723 = vmatprep.subr.mxu0 %v722
    %v724 = vand.u32 %v37, 4294901760
    %v725 = vsub.f32 %v37, %v724
    %v726 = vand.u32 %v725, 4294901760
    %727 = vmatpush1.msra.mxu0 %v726
    %v728 = vand.u32 %v41, 4294901760
    %v729 = vsub.f32 %v41, %v728
    %v730 = vand.u32 %v729, 4294901760
    %731 = vmatprep.subr.mxu0 %v730
    %v732 = vand.u32 %v40, 4294901760
    %v733 = vsub.f32 %v40, %v732
    %v734 = vand.u32 %v733, 4294901760
    %735 = vmatpush1.msra.mxu0 %v734
    %v736 = vand.u32 %v44, 4294901760
    %v737 = vsub.f32 %v44, %v736
    %v738 = vand.u32 %v737, 4294901760
    %739 = vmatprep.subr.mxu0 %v738
    %v740 = vand.u32 %v43, 4294901760
    %v741 = vsub.f32 %v43, %v740
    %v742 = vand.u32 %v741, 4294901760
    %743 = vmatpush1.msra.mxu0 %v742
    %v744 = vand.u32 %v47, 4294901760
    %v745 = vsub.f32 %v47, %v744
    %v746 = vand.u32 %v745, 4294901760
    %747 = vmatprep.subr.mxu0 %v746
    %v748 = vand.u32 %v46, 4294901760
    %v749 = vsub.f32 %v46, %v748
    %v750 = vand.u32 %v749, 4294901760
    %751 = vmatpush1.msra.mxu0 %v750
    %v752 = vand.u32 %v50, 4294901760
    %v753 = vsub.f32 %v50, %v752
    %v754 = vand.u32 %v753, 4294901760
    %755 = vmatprep.subr.mxu0 %v754
    %v756 = vand.u32 %v49, 4294901760
    %v757 = vsub.f32 %v49, %v756
    %v758 = vand.u32 %v757, 4294901760
    %759 = vmatpush1.msra.mxu0 %v758
    %v760 = vand.u32 %v53, 4294901760
    %v761 = vsub.f32 %v53, %v760
    %v762 = vand.u32 %v761, 4294901760
    %763 = vmatprep.subr.mxu0 %v762
    %v764 = vand.u32 %v52, 4294901760
    %v765 = vsub.f32 %v52, %v764
    %v766 = vand.u32 %v765, 4294901760
    %767 = vmatpush1.msra.mxu0 %v766
    %v768 = vand.u32 %v56, 4294901760
    %v769 = vsub.f32 %v56, %v768
    %v770 = vand.u32 %v769, 4294901760
    %771 = vmatprep.subr.mxu0 %v770
    %v772 = vand.u32 %v55, 4294901760
    %v773 = vsub.f32 %v55, %v772
    %v774 = vand.u32 %v773, 4294901760
    %775 = vmatpush1.msra.mxu0 %v774
    %v776 = vand.u32 %v59, 4294901760
    %v777 = vsub.f32 %v59, %v776
    %v778 = vand.u32 %v777, 4294901760
    %779 = vmatprep.subr.mxu0 %v778
    %v780 = vand.u32 %v58, 4294901760
    %v781 = vsub.f32 %v58, %v780
    %v782 = vand.u32 %v781, 4294901760
    %783 = vmatpush1.msra.mxu0 %v782
    %v784 = vand.u32 %v62, 4294901760
    %v785 = vsub.f32 %v62, %v784
    %v786 = vand.u32 %v785, 4294901760
    %787 = vmatprep.subr.mxu0 %v786
    %v788 = vand.u32 %v61, 4294901760
    %v789 = vsub.f32 %v61, %v788
    %v790 = vand.u32 %v789, 4294901760
    %791 = vmatpush1.msra.mxu0 %v790
    %792 = vmatprep.subr.mxu0 0.0
    %793 = vmatpush1.msra.mxu0 0.0
    %794 = vmatprep.subr.mxu0 0.0
    %795 = vmatpush1.msra.mxu0 0.0
    %796 = vmatprep.subr.mxu0 0.0
    %797 = vmatpush1.msra.mxu0 0.0
    %798 = vmatprep.subr.mxu0 0.0
    %799 = vmatpush1.msra.mxu0 0.0
    %800 = vmatprep.subr.mxu0 0.0
    %801 = vmatpush1.msra.mxu0 0.0
    %802 = vmatprep.subr.mxu0 0.0
    %803 = vmatpush1.msra.mxu0 0.0
    %804 = vmatprep.subr.mxu0 0.0
    %805 = vmatpush1.msra.mxu0 0.0
    %806 = vmatprep.subr.mxu0 0.0
    %807 = vmatpush1.msra.mxu0 0.0
    %808 = vmatprep.subr.mxu0 0.0
    %809 = vmatpush1.msra.mxu0 0.0
    %810 = vmatprep.subr.mxu0 0.0
    %811 = vmatpush1.msra.mxu0 0.0
    %812 = vmatprep.subr.mxu0 0.0
    %813 = vmatpush1.msra.mxu0 0.0
    %814 = vmatprep.subr.mxu0 0.0
    %815 = vmatpush1.msra.mxu0 0.0
    %816 = vmatprep.subr.mxu0 0.0
    %817 = vmatpush1.msra.mxu0 0.0
    %818 = vmatprep.subr.mxu0 0.0
    %819 = vmatpush1.msra.mxu0 0.0
    %820 = vmatprep.subr.mxu0 0.0
    %821 = vmatpush1.msra.mxu0 0.0
    %822 = vmatprep.subr.mxu0 0.0
    %823 = vmatpush1.msra.mxu0 0.0
    %824 = vmatprep.mubr.f32.mxu0 0.0
    %v825 = vand.u32 %v15, 4294901760
    %826 = vmatmul.mubr.f32.gmra.mrb[0].mxu0 %v825
    %v827 = vpop.f32.mrb[0].mxu0
    %v828 = vadd.f32 %v660, %v827
    %v829 = vpop.f32.mrb[0].mxu0
    %v830 = vadd.f32 %v662, %v829
    %831 = vdwg.mxu0
    %v832 = vand.u32 %v17, 4294901760
    %833 = vmatprep.subr.mxu0 %v832
    %v834 = vand.u32 %v16, 4294901760
    %835 = vmatpush1.msra.mxu0 %v834
    %v836 = vand.u32 %v20, 4294901760
    %837 = vmatprep.subr.mxu0 %v836
    %v838 = vand.u32 %v19, 4294901760
    %839 = vmatpush1.msra.mxu0 %v838
    %v840 = vand.u32 %v23, 4294901760
    %841 = vmatprep.subr.mxu0 %v840
    %v842 = vand.u32 %v22, 4294901760
    %843 = vmatpush1.msra.mxu0 %v842
    %v844 = vand.u32 %v26, 4294901760
    %845 = vmatprep.subr.mxu0 %v844
    %v846 = vand.u32 %v25, 4294901760
    %847 = vmatpush1.msra.mxu0 %v846
    %v848 = vand.u32 %v29, 4294901760
    %849 = vmatprep.subr.mxu0 %v848
    %v850 = vand.u32 %v28, 4294901760
    %851 = vmatpush1.msra.mxu0 %v850
    %v852 = vand.u32 %v32, 4294901760
    %853 = vmatprep.subr.mxu0 %v852
    %v854 = vand.u32 %v31, 4294901760
    %855 = vmatpush1.msra.mxu0 %v854
    %v856 = vand.u32 %v35, 4294901760
    %857 = vmatprep.subr.mxu0 %v856
    %v858 = vand.u32 %v34, 4294901760
    %859 = vmatpush1.msra.mxu0 %v858
    %v860 = vand.u32 %v38, 4294901760
    %861 = vmatprep.subr.mxu0 %v860
    %v862 = vand.u32 %v37, 4294901760
    %863 = vmatpush1.msra.mxu0 %v862
    %v864 = vand.u32 %v41, 4294901760
    %865 = vmatprep.subr.mxu0 %v864
    %v866 = vand.u32 %v40, 4294901760
    %867 = vmatpush1.msra.mxu0 %v866
    %v868 = vand.u32 %v44, 4294901760
    %869 = vmatprep.subr.mxu0 %v868
    %v870 = vand.u32 %v43, 4294901760
    %871 = vmatpush1.msra.mxu0 %v870
    %v872 = vand.u32 %v47, 4294901760
    %873 = vmatprep.subr.mxu0 %v872
    %v874 = vand.u32 %v46, 4294901760
    %875 = vmatpush1.msra.mxu0 %v874
    %v876 = vand.u32 %v50, 4294901760
    %877 = vmatprep.subr.mxu0 %v876
    %v878 = vand.u32 %v49, 4294901760
    %879 = vmatpush1.msra.mxu0 %v878
    %v880 = vand.u32 %v53, 4294901760
    %881 = vmatprep.subr.mxu0 %v880
    %v882 = vand.u32 %v52, 4294901760
    %883 = vmatpush1.msra.mxu0 %v882
    %v884 = vand.u32 %v56, 4294901760
    %885 = vmatprep.subr.mxu0 %v884
    %v886 = vand.u32 %v55, 4294901760
    %887 = vmatpush1.msra.mxu0 %v886
    %v888 = vand.u32 %v59, 4294901760
    %889 = vmatprep.subr.mxu0 %v888
    %v890 = vand.u32 %v58, 4294901760
    %891 = vmatpush1.msra.mxu0 %v890
    %v892 = vand.u32 %v62, 4294901760
    %893 = vmatprep.subr.mxu0 %v892
    %v894 = vand.u32 %v61, 4294901760
    %895 = vmatpush1.msra.mxu0 %v894
    %896 = vmatprep.subr.mxu0 0.0
    %897 = vmatpush1.msra.mxu0 0.0
    %898 = vmatprep.subr.mxu0 0.0
    %899 = vmatpush1.msra.mxu0 0.0
    %900 = vmatprep.subr.mxu0 0.0
    %901 = vmatpush1.msra.mxu0 0.0
    %902 = vmatprep.subr.mxu0 0.0
    %903 = vmatpush1.msra.mxu0 0.0
    %904 = vmatprep.subr.mxu0 0.0
    %905 = vmatpush1.msra.mxu0 0.0
    %906 = vmatprep.subr.mxu0 0.0
    %907 = vmatpush1.msra.mxu0 0.0
    %908 = vmatprep.subr.mxu0 0.0
    %909 = vmatpush1.msra.mxu0 0.0
    %910 = vmatprep.subr.mxu0 0.0
    %911 = vmatpush1.msra.mxu0 0.0
    %912 = vmatprep.subr.mxu0 0.0
    %913 = vmatpush1.msra.mxu0 0.0
    %914 = vmatprep.subr.mxu0 0.0
    %915 = vmatpush1.msra.mxu0 0.0
    %916 = vmatprep.subr.mxu0 0.0
    %917 = vmatpush1.msra.mxu0 0.0
    %918 = vmatprep.subr.mxu0 0.0
    %919 = vmatpush1.msra.mxu0 0.0
    %920 = vmatprep.subr.mxu0 0.0
    %921 = vmatpush1.msra.mxu0 0.0
    %922 = vmatprep.subr.mxu0 0.0
    %923 = vmatpush1.msra.mxu0 0.0
    %924 = vmatprep.subr.mxu0 0.0
    %925 = vmatpush1.msra.mxu0 0.0
    %926 = vmatprep.subr.mxu0 0.0
    %927 = vmatpush1.msra.mxu0 0.0
    %928 = vmatprep.mubr.f32.mxu0 0.0
    %v929 = vand.u32 %v15, 4294901760
    %930 = vmatmul.mubr.f32.gmra.mrb[0].mxu0 %v929
    %v931 = vpop.f32.mrb[0].mxu0
    %v932 = vadd.f32 %v828, %v931
    %v933 = vpop.f32.mrb[0].mxu0
    %v934 = vadd.f32 %v830, %v933
    %935 = vdwg.mxu0
    %936 = vmatprep.subr.mxu0 0.0
    %v937 = vand.u32 %v18, 4294901760
    %938 = vmatpush1.msra.mxu0 %v937
    %939 = vmatprep.subr.mxu0 0.0
    %v940 = vand.u32 %v21, 4294901760
    %941 = vmatpush1.msra.mxu0 %v940
    %942 = vmatprep.subr.mxu0 0.0
    %v943 = vand.u32 %v24, 4294901760
    %944 = vmatpush1.msra.mxu0 %v943
    %945 = vmatprep.subr.mxu0 0.0
    %v946 = vand.u32 %v27, 4294901760
    %947 = vmatpush1.msra.mxu0 %v946
    %948 = vmatprep.subr.mxu0 0.0
    %v949 = vand.u32 %v30, 4294901760
    %950 = vmatpush1.msra.mxu0 %v949
    %951 = vmatprep.subr.mxu0 0.0
    %v952 = vand.u32 %v33, 4294901760
    %953 = vmatpush1.msra.mxu0 %v952
    %954 = vmatprep.subr.mxu0 0.0
    %v955 = vand.u32 %v36, 4294901760
    %956 = vmatpush1.msra.mxu0 %v955
    %957 = vmatprep.subr.mxu0 0.0
    %v958 = vand.u32 %v39, 4294901760
    %959 = vmatpush1.msra.mxu0 %v958
    %960 = vmatprep.subr.mxu0 0.0
    %v961 = vand.u32 %v42, 4294901760
    %962 = vmatpush1.msra.mxu0 %v961
    %963 = vmatprep.subr.mxu0 0.0
    %v964 = vand.u32 %v45, 4294901760
    %965 = vmatpush1.msra.mxu0 %v964
    %966 = vmatprep.subr.mxu0 0.0
    %v967 = vand.u32 %v48, 4294901760
    %968 = vmatpush1.msra.mxu0 %v967
    %969 = vmatprep.subr.mxu0 0.0
    %v970 = vand.u32 %v51, 4294901760
    %971 = vmatpush1.msra.mxu0 %v970
    %972 = vmatprep.subr.mxu0 0.0
    %v973 = vand.u32 %v54, 4294901760
    %974 = vmatpush1.msra.mxu0 %v973
    %975 = vmatprep.subr.mxu0 0.0
    %v976 = vand.u32 %v57, 4294901760
    %977 = vmatpush1.msra.mxu0 %v976
    %978 = vmatprep.subr.mxu0 0.0
    %v979 = vand.u32 %v60, 4294901760
    %980 = vmatpush1.msra.mxu0 %v979
    %981 = vmatprep.subr.mxu0 0.0
    %v982 = vand.u32 %v63, 4294901760
    %983 = vmatpush1.msra.mxu0 %v982
    %984 = vmatprep.subr.mxu0 0.0
    %985 = vmatpush1.msra.mxu0 0.0
    %986 = vmatprep.subr.mxu0 0.0
    %987 = vmatpush1.msra.mxu0 0.0
    %988 = vmatprep.subr.mxu0 0.0
    %989 = vmatpush1.msra.mxu0 0.0
    %990 = vmatprep.subr.mxu0 0.0
    %991 = vmatpush1.msra.mxu0 0.0
    %992 = vmatprep.subr.mxu0 0.0
    %993 = vmatpush1.msra.mxu0 0.0
    %994 = vmatprep.subr.mxu0 0.0
    %995 = vmatpush1.msra.mxu0 0.0
    %996 = vmatprep.subr.mxu0 0.0
    %997 = vmatpush1.msra.mxu0 0.0
    %998 = vmatprep.subr.mxu0 0.0
    %999 = vmatpush1.msra.mxu0 0.0
    %1000 = vmatprep.subr.mxu0 0.0
    %1001 = vmatpush1.msra.mxu0 0.0
    %1002 = vmatprep.subr.mxu0 0.0
    %1003 = vmatpush1.msra.mxu0 0.0
    %1004 = vmatprep.subr.mxu0 0.0
    %1005 = vmatpush1.msra.mxu0 0.0
    %1006 = vmatprep.subr.mxu0 0.0
    %1007 = vmatpush1.msra.mxu0 0.0
    %1008 = vmatprep.subr.mxu0 0.0
    %1009 = vmatpush1.msra.mxu0 0.0
    %1010 = vmatprep.subr.mxu0 0.0
    %1011 = vmatpush1.msra.mxu0 0.0
    %1012 = vmatprep.subr.mxu0 0.0
    %1013 = vmatpush1.msra.mxu0 0.0
    %1014 = vmatprep.subr.mxu0 0.0
    %1015 = vmatpush1.msra.mxu0 0.0
    %1016 = vmatprep.mubr.f32.mxu0 0.0
    %v1017 = vand.u32 %v15, 4294901760
    %v1018 = vsub.f32 %v15, %v1017
    %v1019 = vand.u32 %v1018, 4294901760
    %v1020 = vsub.f32 %v1018, %v1019
    %v1021 = vand.u32 %v1020, 4294901760
    %1022 = vmatmul.mubr.f32.gmra.mrb[0].mxu0 %v1021
    %v1023 = vpop.f32.mrb[0].mxu0
    %v1024 = vadd.f32 %v77, %v1023
    %v1025 = vpop.f32.mrb[0].mxu0
    %1026 = vdwg.mxu0
    %1027 = vmatprep.subr.mxu0 0.0
    %v1028 = vand.u32 %v18, 4294901760
    %v1029 = vsub.f32 %v18, %v1028
    %v1030 = vand.u32 %v1029, 4294901760
    %v1031 = vsub.f32 %v1029, %v1030
    %v1032 = vand.u32 %v1031, 4294901760
    %1033 = vmatpush1.msra.mxu0 %v1032
    %1034 = vmatprep.subr.mxu0 0.0
    %v1035 = vand.u32 %v21, 4294901760
    %v1036 = vsub.f32 %v21, %v1035
    %v1037 = vand.u32 %v1036, 4294901760
    %v1038 = vsub.f32 %v1036, %v1037
    %v1039 = vand.u32 %v1038, 4294901760
    %1040 = vmatpush1.msra.mxu0 %v1039
    %1041 = vmatprep.subr.mxu0 0.0
    %v1042 = vand.u32 %v24, 4294901760
    %v1043 = vsub.f32 %v24, %v1042
    %v1044 = vand.u32 %v1043, 4294901760
    %v1045 = vsub.f32 %v1043, %v1044
    %v1046 = vand.u32 %v1045, 4294901760
    %1047 = vmatpush1.msra.mxu0 %v1046
    %1048 = vmatprep.subr.mxu0 0.0
    %v1049 = vand.u32 %v27, 4294901760
    %v1050 = vsub.f32 %v27, %v1049
    %v1051 = vand.u32 %v1050, 4294901760
    %v1052 = vsub.f32 %v1050, %v1051
    %v1053 = vand.u32 %v1052, 4294901760
    %1054 = vmatpush1.msra.mxu0 %v1053
    %1055 = vmatprep.subr.mxu0 0.0
    %v1056 = vand.u32 %v30, 4294901760
    %v1057 = vsub.f32 %v30, %v1056
    %v1058 = vand.u32 %v1057, 4294901760
    %v1059 = vsub.f32 %v1057, %v1058
    %v1060 = vand.u32 %v1059, 4294901760
    %1061 = vmatpush1.msra.mxu0 %v1060
    %1062 = vmatprep.subr.mxu0 0.0
    %v1063 = vand.u32 %v33, 4294901760
    %v1064 = vsub.f32 %v33, %v1063
    %v1065 = vand.u32 %v1064, 4294901760
    %v1066 = vsub.f32 %v1064, %v1065
    %v1067 = vand.u32 %v1066, 4294901760
    %1068 = vmatpush1.msra.mxu0 %v1067
    %1069 = vmatprep.subr.mxu0 0.0
    %v1070 = vand.u32 %v36, 4294901760
    %v1071 = vsub.f32 %v36, %v1070
    %v1072 = vand.u32 %v1071, 4294901760
    %v1073 = vsub.f32 %v1071, %v1072
    %v1074 = vand.u32 %v1073, 4294901760
    %1075 = vmatpush1.msra.mxu0 %v1074
    %1076 = vmatprep.subr.mxu0 0.0
    %v1077 = vand.u32 %v39, 4294901760
    %v1078 = vsub.f32 %v39, %v1077
    %v1079 = vand.u32 %v1078, 4294901760
    %v1080 = vsub.f32 %v1078, %v1079
    %v1081 = vand.u32 %v1080, 4294901760
    %1082 = vmatpush1.msra.mxu0 %v1081
    %1083 = vmatprep.subr.mxu0 0.0
    %v1084 = vand.u32 %v42, 4294901760
    %v1085 = vsub.f32 %v42, %v1084
    %v1086 = vand.u32 %v1085, 4294901760
    %v1087 = vsub.f32 %v1085, %v1086
    %v1088 = vand.u32 %v1087, 4294901760
    %1089 = vmatpush1.msra.mxu0 %v1088
    %1090 = vmatprep.subr.mxu0 0.0
    %v1091 = vand.u32 %v45, 4294901760
    %v1092 = vsub.f32 %v45, %v1091
    %v1093 = vand.u32 %v1092, 4294901760
    %v1094 = vsub.f32 %v1092, %v1093
    %v1095 = vand.u32 %v1094, 4294901760
    %1096 = vmatpush1.msra.mxu0 %v1095
    %1097 = vmatprep.subr.mxu0 0.0
    %v1098 = vand.u32 %v48, 4294901760
    %v1099 = vsub.f32 %v48, %v1098
    %v1100 = vand.u32 %v1099, 4294901760
    %v1101 = vsub.f32 %v1099, %v1100
    %v1102 = vand.u32 %v1101, 4294901760
    %1103 = vmatpush1.msra.mxu0 %v1102
    %1104 = vmatprep.subr.mxu0 0.0
    %v1105 = vand.u32 %v51, 4294901760
    %v1106 = vsub.f32 %v51, %v1105
    %v1107 = vand.u32 %v1106, 4294901760
    %v1108 = vsub.f32 %v1106, %v1107
    %v1109 = vand.u32 %v1108, 4294901760
    %1110 = vmatpush1.msra.mxu0 %v1109
    %1111 = vmatprep.subr.mxu0 0.0
    %v1112 = vand.u32 %v54, 4294901760
    %v1113 = vsub.f32 %v54, %v1112
    %v1114 = vand.u32 %v1113, 4294901760
    %v1115 = vsub.f32 %v1113, %v1114
    %v1116 = vand.u32 %v1115, 4294901760
    %1117 = vmatpush1.msra.mxu0 %v1116
    %1118 = vmatprep.subr.mxu0 0.0
    %v1119 = vand.u32 %v57, 4294901760
    %v1120 = vsub.f32 %v57, %v1119
    %v1121 = vand.u32 %v1120, 4294901760
    %v1122 = vsub.f32 %v1120, %v1121
    %v1123 = vand.u32 %v1122, 4294901760
    %1124 = vmatpush1.msra.mxu0 %v1123
    %1125 = vmatprep.subr.mxu0 0.0
    %v1126 = vand.u32 %v60, 4294901760
    %v1127 = vsub.f32 %v60, %v1126
    %v1128 = vand.u32 %v1127, 4294901760
    %v1129 = vsub.f32 %v1127, %v1128
    %v1130 = vand.u32 %v1129, 4294901760
    %1131 = vmatpush1.msra.mxu0 %v1130
    %1132 = vmatprep.subr.mxu0 0.0
    %v1133 = vand.u32 %v63, 4294901760
    %v1134 = vsub.f32 %v63, %v1133
    %v1135 = vand.u32 %v1134, 4294901760
    %v1136 = vsub.f32 %v1134, %v1135
    %v1137 = vand.u32 %v1136, 4294901760
    %1138 = vmatpush1.msra.mxu0 %v1137
    %1139 = vmatprep.subr.mxu0 0.0
    %1140 = vmatpush1.msra.mxu0 0.0
    %1141 = vmatprep.subr.mxu0 0.0
    %1142 = vmatpush1.msra.mxu0 0.0
    %1143 = vmatprep.subr.mxu0 0.0
    %1144 = vmatpush1.msra.mxu0 0.0
    %1145 = vmatprep.subr.mxu0 0.0
    %1146 = vmatpush1.msra.mxu0 0.0
    %1147 = vmatprep.subr.mxu0 0.0
    %1148 = vmatpush1.msra.mxu0 0.0
    %1149 = vmatprep.subr.mxu0 0.0
    %1150 = vmatpush1.msra.mxu0 0.0
    %1151 = vmatprep.subr.mxu0 0.0
    %1152 = vmatpush1.msra.mxu0 0.0
    %1153 = vmatprep.subr.mxu0 0.0
    %1154 = vmatpush1.msra.mxu0 0.0
    %1155 = vmatprep.subr.mxu0 0.0
    %1156 = vmatpush1.msra.mxu0 0.0
    %1157 = vmatprep.subr.mxu0 0.0
    %1158 = vmatpush1.msra.mxu0 0.0
    %1159 = vmatprep.subr.mxu0 0.0
    %1160 = vmatpush1.msra.mxu0 0.0
    %1161 = vmatprep.subr.mxu0 0.0
    %1162 = vmatpush1.msra.mxu0 0.0
    %1163 = vmatprep.subr.mxu0 0.0
    %1164 = vmatpush1.msra.mxu0 0.0
    %1165 = vmatprep.subr.mxu0 0.0
    %1166 = vmatpush1.msra.mxu0 0.0
    %1167 = vmatprep.subr.mxu0 0.0
    %1168 = vmatpush1.msra.mxu0 0.0
    %1169 = vmatprep.subr.mxu0 0.0
    %1170 = vmatpush1.msra.mxu0 0.0
    %1171 = vmatprep.mubr.f32.mxu0 0.0
    %v1172 = vand.u32 %v15, 4294901760
    %1173 = vmatmul.mubr.f32.gmra.mrb[0].mxu0 %v1172
    %v1174 = vpop.f32.mrb[0].mxu0
    %v1175 = vadd.f32 %v1024, %v1174
    %v1176 = vpop.f32.mrb[0].mxu0
    %1177 = vdwg.mxu0
    %1178 = vmatprep.subr.mxu0 0.0
    %v1179 = vand.u32 %v18, 4294901760
    %v1180 = vsub.f32 %v18, %v1179
    %1181 = vmatpush1.msra.mxu0 %v1180
    %1182 = vmatprep.subr.mxu0 0.0
    %v1183 = vand.u32 %v21, 4294901760
    %v1184 = vsub.f32 %v21, %v1183
    %1185 = vmatpush1.msra.mxu0 %v1184
    %1186 = vmatprep.subr.mxu0 0.0
    %v1187 = vand.u32 %v24, 4294901760
    %v1188 = vsub.f32 %v24, %v1187
    %1189 = vmatpush1.msra.mxu0 %v1188
    %1190 = vmatprep.subr.mxu0 0.0
    %v1191 = vand.u32 %v27, 4294901760
    %v1192 = vsub.f32 %v27, %v1191
    %1193 = vmatpush1.msra.mxu0 %v1192
    %1194 = vmatprep.subr.mxu0 0.0
    %v1195 = vand.u32 %v30, 4294901760
    %v1196 = vsub.f32 %v30, %v1195
    %1197 = vmatpush1.msra.mxu0 %v1196
    %1198 = vmatprep.subr.mxu0 0.0
    %v1199 = vand.u32 %v33, 4294901760
    %v1200 = vsub.f32 %v33, %v1199
    %1201 = vmatpush1.msra.mxu0 %v1200
    %1202 = vmatprep.subr.mxu0 0.0
    %v1203 = vand.u32 %v36, 4294901760
    %v1204 = vsub.f32 %v36, %v1203
    %1205 = vmatpush1.msra.mxu0 %v1204
    %1206 = vmatprep.subr.mxu0 0.0
    %v1207 = vand.u32 %v39, 4294901760
    %v1208 = vsub.f32 %v39, %v1207
    %1209 = vmatpush1.msra.mxu0 %v1208
    %1210 = vmatprep.subr.mxu0 0.0
    %v1211 = vand.u32 %v42, 4294901760
    %v1212 = vsub.f32 %v42, %v1211
    %1213 = vmatpush1.msra.mxu0 %v1212
    %1214 = vmatprep.subr.mxu0 0.0
    %v1215 = vand.u32 %v45, 4294901760
    %v1216 = vsub.f32 %v45, %v1215
    %1217 = vmatpush1.msra.mxu0 %v1216
    %1218 = vmatprep.subr.mxu0 0.0
    %v1219 = vand.u32 %v48, 4294901760
    %v1220 = vsub.f32 %v48, %v1219
    %1221 = vmatpush1.msra.mxu0 %v1220
    %1222 = vmatprep.subr.mxu0 0.0
    %v1223 = vand.u32 %v51, 4294901760
    %v1224 = vsub.f32 %v51, %v1223
    %1225 = vmatpush1.msra.mxu0 %v1224
    %1226 = vmatprep.subr.mxu0 0.0
    %v1227 = vand.u32 %v54, 4294901760
    %v1228 = vsub.f32 %v54, %v1227
    %1229 = vmatpush1.msra.mxu0 %v1228
    %1230 = vmatprep.subr.mxu0 0.0
    %v1231 = vand.u32 %v57, 4294901760
    %v1232 = vsub.f32 %v57, %v1231
    %1233 = vmatpush1.msra.mxu0 %v1232
    %1234 = vmatprep.subr.mxu0 0.0
    %v1235 = vand.u32 %v60, 4294901760
    %v1236 = vsub.f32 %v60, %v1235
    %1237 = vmatpush1.msra.mxu0 %v1236
    %1238 = vmatprep.subr.mxu0 0.0
    %v1239 = vand.u32 %v63, 4294901760
    %v1240 = vsub.f32 %v63, %v1239
    %1241 = vmatpush1.msra.mxu0 %v1240
    %1242 = vmatprep.subr.mxu0 0.0
    %1243 = vmatpush1.msra.mxu0 0.0
    %1244 = vmatprep.subr.mxu0 0.0
    %1245 = vmatpush1.msra.mxu0 0.0
    %1246 = vmatprep.subr.mxu0 0.0
    %1247 = vmatpush1.msra.mxu0 0.0
    %1248 = vmatprep.subr.mxu0 0.0
    %1249 = vmatpush1.msra.mxu0 0.0
    %1250 = vmatprep.subr.mxu0 0.0
    %1251 = vmatpush1.msra.mxu0 0.0
    %1252 = vmatprep.subr.mxu0 0.0
    %1253 = vmatpush1.msra.mxu0 0.0
    %1254 = vmatprep.subr.mxu0 0.0
    %1255 = vmatpush1.msra.mxu0 0.0
    %1256 = vmatprep.subr.mxu0 0.0
    %1257 = vmatpush1.msra.mxu0 0.0
    %1258 = vmatprep.subr.mxu0 0.0
    %1259 = vmatpush1.msra.mxu0 0.0
    %1260 = vmatprep.subr.mxu0 0.0
    %1261 = vmatpush1.msra.mxu0 0.0
    %1262 = vmatprep.subr.mxu0 0.0
    %1263 = vmatpush1.msra.mxu0 0.0
    %1264 = vmatprep.subr.mxu0 0.0
    %1265 = vmatpush1.msra.mxu0 0.0
    %1266 = vmatprep.subr.mxu0 0.0
    %1267 = vmatpush1.msra.mxu0 0.0
    %1268 = vmatprep.subr.mxu0 0.0
    %1269 = vmatpush1.msra.mxu0 0.0
    %1270 = vmatprep.subr.mxu0 0.0
    %1271 = vmatpush1.msra.mxu0 0.0
    %1272 = vmatprep.subr.mxu0 0.0
    %1273 = vmatpush1.msra.mxu0 0.0
    %1274 = vmatprep.mubr.f32.mxu0 0.0
    %v1275 = vand.u32 %v15, 4294901760
    %v1276 = vsub.f32 %v15, %v1275
    %1277 = vmatmul.mubr.f32.gmra.mrb[0].mxu0 %v1276
    %v1278 = vpop.f32.mrb[0].mxu0
    %v1279 = vadd.f32 %v1175, %v1278
    %v1280 = vpop.f32.mrb[0].mxu0
    %1281 = vdwg.mxu0
    %1282 = vmatprep.subr.mxu0 0.0
    %v1283 = vand.u32 %v18, 4294901760
    %1284 = vmatpush1.msra.mxu0 %v1283
    %1285 = vmatprep.subr.mxu0 0.0
    %v1286 = vand.u32 %v21, 4294901760
    %1287 = vmatpush1.msra.mxu0 %v1286
    %1288 = vmatprep.subr.mxu0 0.0
    %v1289 = vand.u32 %v24, 4294901760
    %1290 = vmatpush1.msra.mxu0 %v1289
    %1291 = vmatprep.subr.mxu0 0.0
    %v1292 = vand.u32 %v27, 4294901760
    %1293 = vmatpush1.msra.mxu0 %v1292
    %1294 = vmatprep.subr.mxu0 0.0
    %v1295 = vand.u32 %v30, 4294901760
    %1296 = vmatpush1.msra.mxu0 %v1295
    %1297 = vmatprep.subr.mxu0 0.0
    %v1298 = vand.u32 %v33, 4294901760
    %1299 = vmatpush1.msra.mxu0 %v1298
    %1300 = vmatprep.subr.mxu0 0.0
    %v1301 = vand.u32 %v36, 4294901760
    %1302 = vmatpush1.msra.mxu0 %v1301
    %1303 = vmatprep.subr.mxu0 0.0
    %v1304 = vand.u32 %v39, 4294901760
    %1305 = vmatpush1.msra.mxu0 %v1304
    %1306 = vmatprep.subr.mxu0 0.0
    %v1307 = vand.u32 %v42, 4294901760
    %1308 = vmatpush1.msra.mxu0 %v1307
    %1309 = vmatprep.subr.mxu0 0.0
    %v1310 = vand.u32 %v45, 4294901760
    %1311 = vmatpush1.msra.mxu0 %v1310
    %1312 = vmatprep.subr.mxu0 0.0
    %v1313 = vand.u32 %v48, 4294901760
    %1314 = vmatpush1.msra.mxu0 %v1313
    %1315 = vmatprep.subr.mxu0 0.0
    %v1316 = vand.u32 %v51, 4294901760
    %1317 = vmatpush1.msra.mxu0 %v1316
    %1318 = vmatprep.subr.mxu0 0.0
    %v1319 = vand.u32 %v54, 4294901760
    %1320 = vmatpush1.msra.mxu0 %v1319
    %1321 = vmatprep.subr.mxu0 0.0
    %v1322 = vand.u32 %v57, 4294901760
    %1323 = vmatpush1.msra.mxu0 %v1322
    %1324 = vmatprep.subr.mxu0 0.0
    %v1325 = vand.u32 %v60, 4294901760
    %1326 = vmatpush1.msra.mxu0 %v1325
    %1327 = vmatprep.subr.mxu0 0.0
    %v1328 = vand.u32 %v63, 4294901760
    %1329 = vmatpush1.msra.mxu0 %v1328
    %1330 = vmatprep.subr.mxu0 0.0
    %1331 = vmatpush1.msra.mxu0 0.0
    %1332 = vmatprep.subr.mxu0 0.0
    %1333 = vmatpush1.msra.mxu0 0.0
    %1334 = vmatprep.subr.mxu0 0.0
    %1335 = vmatpush1.msra.mxu0 0.0
    %1336 = vmatprep.subr.mxu0 0.0
    %1337 = vmatpush1.msra.mxu0 0.0
    %1338 = vmatprep.subr.mxu0 0.0
    %1339 = vmatpush1.msra.mxu0 0.0
    %1340 = vmatprep.subr.mxu0 0.0
    %1341 = vmatpush1.msra.mxu0 0.0
    %1342 = vmatprep.subr.mxu0 0.0
    %1343 = vmatpush1.msra.mxu0 0.0
    %1344 = vmatprep.subr.mxu0 0.0
    %1345 = vmatpush1.msra.mxu0 0.0
    %1346 = vmatprep.subr.mxu0 0.0
    %1347 = vmatpush1.msra.mxu0 0.0
    %1348 = vmatprep.subr.mxu0 0.0
    %1349 = vmatpush1.msra.mxu0 0.0
    %1350 = vmatprep.subr.mxu0 0.0
    %1351 = vmatpush1.msra.mxu0 0.0
    %1352 = vmatprep.subr.mxu0 0.0
    %1353 = vmatpush1.msra.mxu0 0.0
    %1354 = vmatprep.subr.mxu0 0.0
    %1355 = vmatpush1.msra.mxu0 0.0
    %1356 = vmatprep.subr.mxu0 0.0
    %1357 = vmatpush1.msra.mxu0 0.0
    %1358 = vmatprep.subr.mxu0 0.0
    %1359 = vmatpush1.msra.mxu0 0.0
    %1360 = vmatprep.subr.mxu0 0.0
    %1361 = vmatpush1.msra.mxu0 0.0
    %1362 = vmatprep.mubr.f32.mxu0 0.0
    %v1363 = vand.u32 %v15, 4294901760
    %v1364 = vsub.f32 %v15, %v1363
    %v1365 = vand.u32 %v1364, 4294901760
    %1366 = vmatmul.mubr.f32.gmra.mrb[0].mxu0 %v1365
    %v1367 = vpop.f32.mrb[0].mxu0
    %v1368 = vadd.f32 %v1279, %v1367
    %v1369 = vpop.f32.mrb[0].mxu0
    %1370 = vdwg.mxu0
    %1371 = vmatprep.subr.mxu0 0.0
    %v1372 = vand.u32 %v18, 4294901760
    %v1373 = vsub.f32 %v18, %v1372
    %v1374 = vand.u32 %v1373, 4294901760
    %1375 = vmatpush1.msra.mxu0 %v1374
    %1376 = vmatprep.subr.mxu0 0.0
    %v1377 = vand.u32 %v21, 4294901760
    %v1378 = vsub.f32 %v21, %v1377
    %v1379 = vand.u32 %v1378, 4294901760
    %1380 = vmatpush1.msra.mxu0 %v1379
    %1381 = vmatprep.subr.mxu0 0.0
    %v1382 = vand.u32 %v24, 4294901760
    %v1383 = vsub.f32 %v24, %v1382
    %v1384 = vand.u32 %v1383, 4294901760
    %1385 = vmatpush1.msra.mxu0 %v1384
    %1386 = vmatprep.subr.mxu0 0.0
    %v1387 = vand.u32 %v27, 4294901760
    %v1388 = vsub.f32 %v27, %v1387
    %v1389 = vand.u32 %v1388, 4294901760
    %1390 = vmatpush1.msra.mxu0 %v1389
    %1391 = vmatprep.subr.mxu0 0.0
    %v1392 = vand.u32 %v30, 4294901760
    %v1393 = vsub.f32 %v30, %v1392
    %v1394 = vand.u32 %v1393, 4294901760
    %1395 = vmatpush1.msra.mxu0 %v1394
    %1396 = vmatprep.subr.mxu0 0.0
    %v1397 = vand.u32 %v33, 4294901760
    %v1398 = vsub.f32 %v33, %v1397
    %v1399 = vand.u32 %v1398, 4294901760
    %1400 = vmatpush1.msra.mxu0 %v1399
    %1401 = vmatprep.subr.mxu0 0.0
    %v1402 = vand.u32 %v36, 4294901760
    %v1403 = vsub.f32 %v36, %v1402
    %v1404 = vand.u32 %v1403, 4294901760
    %1405 = vmatpush1.msra.mxu0 %v1404
    %1406 = vmatprep.subr.mxu0 0.0
    %v1407 = vand.u32 %v39, 4294901760
    %v1408 = vsub.f32 %v39, %v1407
    %v1409 = vand.u32 %v1408, 4294901760
    %1410 = vmatpush1.msra.mxu0 %v1409
    %1411 = vmatprep.subr.mxu0 0.0
    %v1412 = vand.u32 %v42, 4294901760
    %v1413 = vsub.f32 %v42, %v1412
    %v1414 = vand.u32 %v1413, 4294901760
    %1415 = vmatpush1.msra.mxu0 %v1414
    %1416 = vmatprep.subr.mxu0 0.0
    %v1417 = vand.u32 %v45, 4294901760
    %v1418 = vsub.f32 %v45, %v1417
    %v1419 = vand.u32 %v1418, 4294901760
    %1420 = vmatpush1.msra.mxu0 %v1419
    %1421 = vmatprep.subr.mxu0 0.0
    %v1422 = vand.u32 %v48, 4294901760
    %v1423 = vsub.f32 %v48, %v1422
    %v1424 = vand.u32 %v1423, 4294901760
    %1425 = vmatpush1.msra.mxu0 %v1424
    %1426 = vmatprep.subr.mxu0 0.0
    %v1427 = vand.u32 %v51, 4294901760
    %v1428 = vsub.f32 %v51, %v1427
    %v1429 = vand.u32 %v1428, 4294901760
    %1430 = vmatpush1.msra.mxu0 %v1429
    %1431 = vmatprep.subr.mxu0 0.0
    %v1432 = vand.u32 %v54, 4294901760
    %v1433 = vsub.f32 %v54, %v1432
    %v1434 = vand.u32 %v1433, 4294901760
    %1435 = vmatpush1.msra.mxu0 %v1434
    %1436 = vmatprep.subr.mxu0 0.0
    %v1437 = vand.u32 %v57, 4294901760
    %v1438 = vsub.f32 %v57, %v1437
    %v1439 = vand.u32 %v1438, 4294901760
    %1440 = vmatpush1.msra.mxu0 %v1439
    %1441 = vmatprep.subr.mxu0 0.0
    %v1442 = vand.u32 %v60, 4294901760
    %v1443 = vsub.f32 %v60, %v1442
    %v1444 = vand.u32 %v1443, 4294901760
    %1445 = vmatpush1.msra.mxu0 %v1444
    %1446 = vmatprep.subr.mxu0 0.0
    %v1447 = vand.u32 %v63, 4294901760
    %v1448 = vsub.f32 %v63, %v1447
    %v1449 = vand.u32 %v1448, 4294901760
    %1450 = vmatpush1.msra.mxu0 %v1449
    %1451 = vmatprep.subr.mxu0 0.0
    %1452 = vmatpush1.msra.mxu0 0.0
    %1453 = vmatprep.subr.mxu0 0.0
    %1454 = vmatpush1.msra.mxu0 0.0
    %1455 = vmatprep.subr.mxu0 0.0
    %1456 = vmatpush1.msra.mxu0 0.0
    %1457 = vmatprep.subr.mxu0 0.0
    %1458 = vmatpush1.msra.mxu0 0.0
    %1459 = vmatprep.subr.mxu0 0.0
    %1460 = vmatpush1.msra.mxu0 0.0
    %1461 = vmatprep.subr.mxu0 0.0
    %1462 = vmatpush1.msra.mxu0 0.0
    %1463 = vmatprep.subr.mxu0 0.0
    %1464 = vmatpush1.msra.mxu0 0.0
    %1465 = vmatprep.subr.mxu0 0.0
    %1466 = vmatpush1.msra.mxu0 0.0
    %1467 = vmatprep.subr.mxu0 0.0
    %1468 = vmatpush1.msra.mxu0 0.0
    %1469 = vmatprep.subr.mxu0 0.0
    %1470 = vmatpush1.msra.mxu0 0.0
    %1471 = vmatprep.subr.mxu0 0.0
    %1472 = vmatpush1.msra.mxu0 0.0
    %1473 = vmatprep.subr.mxu0 0.0
    %1474 = vmatpush1.msra.mxu0 0.0
    %1475 = vmatprep.subr.mxu0 0.0
    %1476 = vmatpush1.msra.mxu0 0.0
    %1477 = vmatprep.subr.mxu0 0.0
    %1478 = vmatpush1.msra.mxu0 0.0
    %1479 = vmatprep.subr.mxu0 0.0
    %1480 = vmatpush1.msra.mxu0 0.0
    %1481 = vmatprep.subr.mxu0 0.0
    %1482 = vmatpush1.msra.mxu0 0.0
    %1483 = vmatprep.mubr.f32.mxu0 0.0
    %v1484 = vand.u32 %v15, 4294901760
    %1485 = vmatmul.mubr.f32.gmra.mrb[0].mxu0 %v1484
    %v1486 = vpop.f32.mrb[0].mxu0
    %v1487 = vadd.f32 %v1368, %v1486
    %v1488 = vpop.f32.mrb[0].mxu0
    %1489 = vdwg.mxu0
    %1490 = vmatprep.subr.mxu0 0.0
    %v1491 = vand.u32 %v18, 4294901760
    %1492 = vmatpush1.msra.mxu0 %v1491
    %1493 = vmatprep.subr.mxu0 0.0
    %v1494 = vand.u32 %v21, 4294901760
    %1495 = vmatpush1.msra.mxu0 %v1494
    %1496 = vmatprep.subr.mxu0 0.0
    %v1497 = vand.u32 %v24, 4294901760
    %1498 = vmatpush1.msra.mxu0 %v1497
    %1499 = vmatprep.subr.mxu0 0.0
    %v1500 = vand.u32 %v27, 4294901760
    %1501 = vmatpush1.msra.mxu0 %v1500
    %1502 = vmatprep.subr.mxu0 0.0
    %v1503 = vand.u32 %v30, 4294901760
    %1504 = vmatpush1.msra.mxu0 %v1503
    %1505 = vmatprep.subr.mxu0 0.0
    %v1506 = vand.u32 %v33, 4294901760
    %1507 = vmatpush1.msra.mxu0 %v1506
    %1508 = vmatprep.subr.mxu0 0.0
    %v1509 = vand.u32 %v36, 4294901760
    %1510 = vmatpush1.msra.mxu0 %v1509
    %1511 = vmatprep.subr.mxu0 0.0
    %v1512 = vand.u32 %v39, 4294901760
    %1513 = vmatpush1.msra.mxu0 %v1512
    %1514 = vmatprep.subr.mxu0 0.0
    %v1515 = vand.u32 %v42, 4294901760
    %1516 = vmatpush1.msra.mxu0 %v1515
    %1517 = vmatprep.subr.mxu0 0.0
    %v1518 = vand.u32 %v45, 4294901760
    %1519 = vmatpush1.msra.mxu0 %v1518
    %1520 = vmatprep.subr.mxu0 0.0
    %v1521 = vand.u32 %v48, 4294901760
    %1522 = vmatpush1.msra.mxu0 %v1521
    %1523 = vmatprep.subr.mxu0 0.0
    %v1524 = vand.u32 %v51, 4294901760
    %1525 = vmatpush1.msra.mxu0 %v1524
    %1526 = vmatprep.subr.mxu0 0.0
    %v1527 = vand.u32 %v54, 4294901760
    %1528 = vmatpush1.msra.mxu0 %v1527
    %1529 = vmatprep.subr.mxu0 0.0
    %v1530 = vand.u32 %v57, 4294901760
    %1531 = vmatpush1.msra.mxu0 %v1530
    %1532 = vmatprep.subr.mxu0 0.0
    %v1533 = vand.u32 %v60, 4294901760
    %1534 = vmatpush1.msra.mxu0 %v1533
    %1535 = vmatprep.subr.mxu0 0.0
    %v1536 = vand.u32 %v63, 4294901760
    %1537 = vmatpush1.msra.mxu0 %v1536
    %1538 = vmatprep.subr.mxu0 0.0
    %1539 = vmatpush1.msra.mxu0 0.0
    %1540 = vmatprep.subr.mxu0 0.0
    %1541 = vmatpush1.msra.mxu0 0.0
    %1542 = vmatprep.subr.mxu0 0.0
    %1543 = vmatpush1.msra.mxu0 0.0
    %1544 = vmatprep.subr.mxu0 0.0
    %1545 = vmatpush1.msra.mxu0 0.0
    %1546 = vmatprep.subr.mxu0 0.0
    %1547 = vmatpush1.msra.mxu0 0.0
    %1548 = vmatprep.subr.mxu0 0.0
    %1549 = vmatpush1.msra.mxu0 0.0
    %1550 = vmatprep.subr.mxu0 0.0
    %1551 = vmatpush1.msra.mxu0 0.0
    %1552 = vmatprep.subr.mxu0 0.0
    %1553 = vmatpush1.msra.mxu0 0.0
    %1554 = vmatprep.subr.mxu0 0.0
    %1555 = vmatpush1.msra.mxu0 0.0
    %1556 = vmatprep.subr.mxu0 0.0
    %1557 = vmatpush1.msra.mxu0 0.0
    %1558 = vmatprep.subr.mxu0 0.0
    %1559 = vmatpush1.msra.mxu0 0.0
    %1560 = vmatprep.subr.mxu0 0.0
    %1561 = vmatpush1.msra.mxu0 0.0
    %1562 = vmatprep.subr.mxu0 0.0
    %1563 = vmatpush1.msra.mxu0 0.0
    %1564 = vmatprep.subr.mxu0 0.0
    %1565 = vmatpush1.msra.mxu0 0.0
    %1566 = vmatprep.subr.mxu0 0.0
    %1567 = vmatpush1.msra.mxu0 0.0
    %1568 = vmatprep.subr.mxu0 0.0
    %1569 = vmatpush1.msra.mxu0 0.0
    %1570 = vmatprep.mubr.f32.mxu0 0.0
    %v1571 = vand.u32 %v15, 4294901760
    %1572 = vmatmul.mubr.f32.gmra.mrb[0].mxu0 %v1571
    %v1573 = vpop.f32.mrb[0].mxu0
    %v1574 = vadd.f32 %v1487, %v1573
    %v1575 = vpop.f32.mrb[0].mxu0
    %1576 = vdwg.mxu0
    %v1580 = vcombine.low %v932, %v934
    %v1582 = vunpack.c.l.s4 1983009808
    %v1583 = vunpack.c.0.s8 %v1582
    %v1584 = vlaneseq
    %v1585 = vshrl.u32 %v1584, 7
    %v1586 = vsub.s32 %v1583, %v1585
    %v1587 = vrot.slane %v1580, %v1586
    %v1589 = vunpack.c.l.s4 1983009808
    %v1590 = vunpack.c.0.s8 %v1589
    %v1591 = vlaneseq
    %v1592 = vshrl.u32 %v1591, 7
    %v1593 = vsub.s32 %v1590, %v1592
    %v1594 = vrot.slane %v1574, %v1593
    %v1595 = vcombine.low %v1587, %v1594
    %vm1597 = vcmask 1041408
    %vm1598 = vcmask 1043458
    %vm1599 = vmor %vm1598, %vm1597
    %vm1600 = vcmask 259076
    %vm1601 = vmor %vm1600, %vm1599
    %1602 = vst.msk [vmem:[#allocation2] sm:$0x3f] %vm1601, %v1595
    // Predicated region
    $region14: #{tpu_custom_call.1} parent=1 // pred_check
      _
    $region15: #{tpu_custom_call.1} parent=1 // pred_check_branch
      %1604 = sbr.rel (0) target = $region17
    $region16: #{tpu_custom_call.1} parent=1 // pred_region
      %s1606 = ssub.s32 96, 96
      %1607 = vsyncadd [#allocation3], %s1606
      %s1609 = sshll.u32 [#allocation2], 4
      %s1610 = int_to_ptr.vmem [resolvable:$true] %s1609
      %1612 = dma.vmem_to_hbm [thread:$0]  %s1610, 96, %s3, [#allocation3]
    $region17: #{tpu_custom_call.1} parent=1 // pred_fallthru
      _
    // Predicated region
    $region18: #{tpu_custom_call.1} parent=1 // pred_check
      _
    $region19: #{tpu_custom_call.1} parent=1 // pred_check_branch
      %1614 = sbr.rel (0) target = $region21
    $region20: #{tpu_custom_call.1} parent=1 // pred_region
      %1615 = dma.done [#allocation3], 96
    $region21: #{tpu_custom_call.1} parent=1 // pred_fallthru
      _
    %1616 = vsyncpa [#allocation3], 1

</llo_original>
